<compile_context>
chip_gen: v7x
topology: tpu7x:2x2x1
jax: 0.10.0
libtpu: 0.0.40
codegen_flags: <defaults>
</compile_context>

<pallas_src>
import jax
import jax.numpy as jnp
from jax.experimental import pallas as pl
from jax.experimental.pallas import tpu as pltpu

LP = 128          # lane group width: padded input / hidden / output dims
GW = 3 * LP       # gate-aligned width of the GRU weight & bias blocks (r|z|n)

# Parameter-slab row offsets (must match pack_gru_params).
R_WIH, R_WHH, R_WENC, R_WDEC = 0, 128, 256, 384
R_BIH, R_BHH, R_BENC, R_BDEC = 512, 520, 528, 536
P_ROWS = 544


def gru_waypoints_kernel(data_ref, p_ref, out_ref, h_all_ref):
    """Whole forward pass in VMEM (tiny shapes; gridless).

    data_ref : (W*8 + 8, 128)  rows [t*8 + b] = x (waypoint-major, zero-padded
                               to 8 rows / 128 lanes); rows [W*8 + b] = target
                               point (zero-padded).
    p_ref    : (544, 384)      packed parameter slab (see pack_gru_params).
    out_ref  : (W*8, 128)      cumsum'd waypoints; valid cols 0..1, pad cols 0.
    h_all_ref: (W*8, 128)      VMEM scratch for per-step hidden states.
    """
    n_wp = out_ref.shape[0] // 8

    # ---- parameter views (all slices lane/sublane aligned) ----
    w_ih = p_ref[R_WIH:R_WIH + LP, :]            # (128, 384)
    w_hh = p_ref[R_WHH:R_WHH + LP, :]            # (128, 384)
    w_enc = p_ref[R_WENC:R_WENC + LP, 0:LP]      # (128, 128)
    w_dec = p_ref[R_WDEC:R_WDEC + LP, 0:LP]      # (128, 128)
    b_ih = p_ref[R_BIH:R_BIH + 1, :]             # (1, 384)
    b_hh8 = p_ref[R_BHH:R_BHH + 8, :]            # (8, 384)  pre-replicated
    b_enc8 = p_ref[R_BENC:R_BENC + 8, 0:LP]      # (8, 128)  pre-replicated
    b_dec8 = p_ref[R_BDEC:R_BDEC + 8, 0:LP]      # (8, 128)  pre-replicated

    x_all = data_ref[0:n_wp * 8, :]              # (W*8, 128)
    tp = data_ref[n_wp * 8:n_wp * 8 + 8, :]      # (8, 128)

    # ---- target-point encoder: h0 = tp @ W_enc^T + b_enc (pad lanes = 0) ----
    h = jnp.dot(tp, w_enc, preferred_element_type=jnp.float32) + b_enc8

    # ---- input projection for ALL timesteps in one matmul ----
    gi_all = (jnp.dot(x_all, w_ih, preferred_element_type=jnp.float32)
              + jnp.broadcast_to(b_ih, (n_wp * 8, GW)))            # (W*8, 384)

    # ---- GRU recurrence (PyTorch gate order r|z|n, one 128-lane group each).
    #      Static unroll keeps the chain visible to the LLO scheduler; only
    #      gh = h @ W_hh (+ gate math) is on the serial critical path. ----
    for t in range(n_wp):
        gi = gi_all[t * 8:(t + 1) * 8, :]                           # (8, 384)
        gh = jnp.dot(h, w_hh, preferred_element_type=jnp.float32) + b_hh8
        rz = jax.nn.sigmoid(gi[:, 0:2 * LP] + gh[:, 0:2 * LP])      # (8, 256)
        r = rz[:, 0:LP]
        z = rz[:, LP:2 * LP]
        n = jnp.tanh(gi[:, 2 * LP:GW] + r * gh[:, 2 * LP:GW])       # (8, 128)
        h = n + z * (h - n)                       # == (1 - z) * n + z * h
        h_all_ref[t * 8:(t + 1) * 8, :] = h       # aligned (8,128) store

    # ---- decoder: one matmul over all hidden states ----
    wp = jnp.dot(h_all_ref[...], w_dec, preferred_element_type=jnp.float32)

    # ---- cumulative sum over waypoints (decoder bias accumulates), with
    #      unmasked (8,128) stores into the lane-dense output slab ----
    acc = wp[0:8, :] + b_dec8
    out_ref[0:8, :] = acc
    for t in range(1, n_wp):
        acc = acc + wp[t * 8:(t + 1) * 8, :] + b_dec8
        out_ref[t * 8:(t + 1) * 8, :] = acc


def pack_gru_params(params):
    """Pack all module parameters into one lane/sublane-aligned f32 slab.

    Call ONCE at setup; the resulting (544, 384) array is reused every call.
    Gate g of W_ih / W_hh / b_ih / b_hh occupies columns [g*128, g*128+H);
    all pad rows / lanes are zero so padded lanes of h stay exactly zero.
    """
    (w_enc, b_enc, w_ih, b_ih, w_hh, b_hh, w_dec, b_dec) = params
    hidden = w_hh.shape[1]
    in_dim = w_ih.shape[1]
    tp_dim = w_enc.shape[1]
    assert hidden <= LP and in_dim <= LP and tp_dim <= LP

    def gate_cols(mat_t):  # (K, 3H) -> (K, 384): gate g at cols [g*128, g*128+H)
        k = mat_t.shape[0]
        out = jnp.zeros((k, GW), jnp.float32)
        for g in range(3):
            out = out.at[:, g * LP:g * LP + hidden].set(
                mat_t[:, g * hidden:(g + 1) * hidden])
        return out

    def pad_rows(mat):
        return jnp.pad(mat, ((0, LP - mat.shape[0]), (0, 0)))

    def rep8(row):  # (384,) -> (8, 384) pre-replicated bias block
        return jnp.broadcast_to(row.reshape(1, GW), (8, GW))

    w_ih_blk = pad_rows(gate_cols(w_ih.T.astype(jnp.float32)))        # (128,384)
    w_hh_blk = pad_rows(gate_cols(w_hh.T.astype(jnp.float32)))        # (128,384)
    w_enc_blk = jnp.zeros((LP, GW), jnp.float32).at[:tp_dim, :hidden].set(
        w_enc.T.astype(jnp.float32))                                  # (128,384)
    w_dec_blk = jnp.zeros((LP, GW), jnp.float32).at[:hidden, :2].set(
        w_dec.T.astype(jnp.float32))                                  # (128,384)

    b_ih_blk = rep8(gate_cols(b_ih.reshape(1, -1).astype(jnp.float32))[0])
    b_hh_blk = rep8(gate_cols(b_hh.reshape(1, -1).astype(jnp.float32))[0])
    b_enc_blk = rep8(jnp.zeros((GW,), jnp.float32).at[:hidden].set(b_enc))
    b_dec_blk = rep8(jnp.zeros((GW,), jnp.float32).at[:2].set(b_dec))

    slab = jnp.concatenate([w_ih_blk, w_hh_blk, w_enc_blk, w_dec_blk,
                            b_ih_blk, b_hh_blk, b_enc_blk, b_dec_blk], axis=0)
    assert slab.shape == (P_ROWS, GW)
    return slab


def gru_waypoints_predictor(x, target_point, packed_params):
    """Forward pass. `packed_params` comes from pack_gru_params (built once)."""
    bs, n_wp, in_dim = x.shape
    tp_dim = target_point.shape[1]
    assert bs <= 8 and in_dim <= LP and tp_dim <= LP
    rows = n_wp * 8

    # Per-call data slab: waypoint-major x rows (t*8 + b) followed by the
    # target-point rows, zero-padded to 8 sublanes / 128 lanes.
    xw = jnp.transpose(x, (1, 0, 2)).astype(jnp.float32)              # (W,bs,D)
    xw = jnp.pad(xw, ((0, 0), (0, 8 - bs), (0, LP - in_dim)))         # (W,8,128)
    tpp = jnp.pad(target_point.astype(jnp.float32),
                  ((0, 8 - bs), (0, LP - tp_dim)))                    # (8,128)
    data = jnp.concatenate([xw.reshape(rows, LP), tpp], axis=0)       # (W*8+8,128)

    flops = (2 * rows * LP * GW          # input projection
             + n_wp * 2 * 8 * LP * GW    # recurrence (gh matmuls)
             + 2 * 8 * LP * LP           # encoder
             + 2 * rows * LP * LP)       # decoder
    bytes_accessed = 4 * (P_ROWS * GW + (rows + 8) * LP + 2 * rows * LP)

    # NOTE(v7x): total VMEM footprint is <1 MiB, so the smaller 64 MiB VMEM is
    # irrelevant; keep the single gridless call — splitting an 8-step serial
    # recurrence across TensorCores would only add sync overhead at bs<=8.
    vmem = pl.BlockSpec(memory_space=pltpu.MemorySpace.VMEM)
    out_flat = pl.pallas_call(
        gru_waypoints_kernel,
        out_shape=jax.ShapeDtypeStruct((rows, LP), jnp.float32),
        in_specs=[vmem, vmem],
        out_specs=vmem,
        scratch_shapes=[pltpu.VMEM((rows, LP), jnp.float32)],
        cost_estimate=pl.CostEstimate(flops=flops,
                                      transcendentals=n_wp * 8 * GW,
                                      bytes_accessed=bytes_accessed),
    )(data, packed_params)

    # Lane-dense kernel output -> (bs, W, 2): layout plumbing outside the kernel.
    return jnp.transpose(out_flat.reshape(n_wp, 8, LP)[:, :bs, :2], (1, 0, 2))


def reference_forward(x, target_point, params):
    """Pure-JAX reference matching the PyTorch module semantics."""
    (w_enc, b_enc, w_ih, b_ih, w_hh, b_hh, w_dec, b_dec) = params
    hidden = w_hh.shape[1]
    h = target_point @ w_enc.T + b_enc                       # (bs, H)
    outs = []
    for t in range(x.shape[1]):
        x_t = x[:, t, :]
        gi = x_t @ w_ih.T + b_ih
        gh = h @ w_hh.T + b_hh
        r = jax.nn.sigmoid(gi[:, :hidden] + gh[:, :hidden])
        z = jax.nn.sigmoid(gi[:, hidden:2 * hidden] + gh[:, hidden:2 * hidden])
        n = jnp.tanh(gi[:, 2 * hidden:] + r * gh[:, 2 * hidden:])
        h = (1.0 - z) * n + z * h
        outs.append(h)
    output = jnp.stack(outs, axis=1)                         # (bs, W, H)
    output = output @ w_dec.T + b_dec                        # (bs, W, 2)
    return jnp.cumsum(output, axis=1)


if __name__ == "__main__":
    # Small shapes consistent with the module's forward.
    bs = 2
    input_dim = 32
    waypoints = 8
    hidden_size = 32
    target_point_size = 2

    key = jax.random.PRNGKey(0)
    keys = jax.random.split(key, 10)

    # Deterministic synthetic parameters (PyTorch shapes: weight (out, in)).
    scale = 0.1
    w_enc = scale * jax.random.normal(keys[0], (hidden_size, target_point_size), jnp.float32)
    b_enc = scale * jax.random.normal(keys[1], (hidden_size,), jnp.float32)
    w_ih = scale * jax.random.normal(keys[2], (3 * hidden_size, input_dim), jnp.float32)
    b_ih = scale * jax.random.normal(keys[3], (3 * hidden_size,), jnp.float32)
    w_hh = scale * jax.random.normal(keys[4], (3 * hidden_size, hidden_size), jnp.float32)
    b_hh = scale * jax.random.normal(keys[5], (3 * hidden_size,), jnp.float32)
    w_dec = scale * jax.random.normal(keys[6], (2, hidden_size), jnp.float32)
    b_dec = scale * jax.random.normal(keys[7], (2,), jnp.float32)
    params = (w_enc, b_enc, w_ih, b_ih, w_hh, b_hh, w_dec, b_dec)

    # Inputs.
    x = jax.random.normal(keys[8], (bs, waypoints, input_dim), jnp.float32)
    target_point = jax.random.normal(keys[9], (bs, target_point_size), jnp.float32)

    # Parameter packing happens ONCE at setup (not per call).
    packed = jax.block_until_ready(pack_gru_params(params))

    fwd = jax.jit(gru_waypoints_predictor)
    out = jax.block_until_ready(fwd(x, target_point, packed))

    ref = reference_forward(x, target_point, params)
    assert out.shape == (bs, waypoints, 2)
    assert jnp.allclose(out, ref, atol=1e-5, rtol=1e-5), "kernel mismatch vs reference"

    print("KERNEL_OK")
</pallas_src>

<mosaic_0001>
module attributes {stable_mosaic.version = 11 : i64} {
  func.func @gru_waypoints_kernel(%arg0: memref<72x128xf32, #tpu.memory_space<vmem>>, %arg1: memref<544x384xf32, #tpu.memory_space<vmem>>, %arg2: memref<64x128xf32, #tpu.memory_space<vmem>>, %arg3: memref<64x128xf32, #tpu.memory_space<vmem>>) attributes {dimension_semantics = [], scalar_prefetch = 0 : i64, scratch_operands = 1 : i64, tpu.core_type = #tpu.core_type<tc>} {
    %c0 = arith.constant 0 : index
    %c0_0 = arith.constant 0 : index
    %0 = vector.load %arg1[%c0, %c0_0] : memref<544x384xf32, #tpu.memory_space<vmem>>, vector<128x384xf32>
    %c128 = arith.constant 128 : index
    %c0_1 = arith.constant 0 : index
    %1 = vector.load %arg1[%c128, %c0_1] : memref<544x384xf32, #tpu.memory_space<vmem>>, vector<128x384xf32>
    %c256 = arith.constant 256 : index
    %c0_2 = arith.constant 0 : index
    %2 = vector.load %arg1[%c256, %c0_2] : memref<544x384xf32, #tpu.memory_space<vmem>>, vector<128x128xf32>
    %c384 = arith.constant 384 : index
    %c0_3 = arith.constant 0 : index
    %3 = vector.load %arg1[%c384, %c0_3] : memref<544x384xf32, #tpu.memory_space<vmem>>, vector<128x128xf32>
    %c512 = arith.constant 512 : index
    %c0_4 = arith.constant 0 : index
    %4 = vector.load %arg1[%c512, %c0_4] : memref<544x384xf32, #tpu.memory_space<vmem>>, vector<1x384xf32>
    %c520 = arith.constant 520 : index
    %c0_5 = arith.constant 0 : index
    %5 = vector.load %arg1[%c520, %c0_5] : memref<544x384xf32, #tpu.memory_space<vmem>>, vector<8x384xf32>
    %c528 = arith.constant 528 : index
    %c0_6 = arith.constant 0 : index
    %6 = vector.load %arg1[%c528, %c0_6] : memref<544x384xf32, #tpu.memory_space<vmem>>, vector<8x128xf32>
    %c536 = arith.constant 536 : index
    %c0_7 = arith.constant 0 : index
    %7 = vector.load %arg1[%c536, %c0_7] : memref<544x384xf32, #tpu.memory_space<vmem>>, vector<8x128xf32>
    %c0_8 = arith.constant 0 : index
    %c0_9 = arith.constant 0 : index
    %8 = vector.load %arg0[%c0_8, %c0_9] : memref<72x128xf32, #tpu.memory_space<vmem>>, vector<64x128xf32>
    %c64 = arith.constant 64 : index
    %c0_10 = arith.constant 0 : index
    %9 = vector.load %arg0[%c64, %c0_10] : memref<72x128xf32, #tpu.memory_space<vmem>>, vector<8x128xf32>
    %cst = arith.constant dense<0.000000e+00> : vector<8x128xf32>
    %10 = tpu.matmul %9, %2, %cst {dimension_numbers = #tpu.dot_dimension_numbers<[1], [0], [0], [1], [0, 0, 1, 1], [], []>} : vector<8x128xf32>, vector<128x128xf32>, vector<8x128xf32> -> vector<8x128xf32>
    %11 = arith.addf %10, %6 : vector<8x128xf32>
    %cst_11 = arith.constant dense<0.000000e+00> : vector<64x384xf32>
    %12 = tpu.matmul %8, %0, %cst_11 {dimension_numbers = #tpu.dot_dimension_numbers<[1], [0], [0], [1], [0, 0, 1, 1], [], []>} : vector<64x128xf32>, vector<128x384xf32>, vector<64x384xf32> -> vector<64x384xf32>
    %13 = vector.shape_cast %4 : vector<1x384xf32> to vector<1x384xf32>
    %14 = vector.broadcast %13 : vector<1x384xf32> to vector<64x384xf32>
    %15 = arith.addf %12, %14 : vector<64x384xf32>
    %16 = vector.extract_strided_slice %15 {offsets = [0, 0], sizes = [8, 384], strides = [1, 1]} : vector<64x384xf32> to vector<8x384xf32>
    %cst_12 = arith.constant dense<0.000000e+00> : vector<8x384xf32>
    %17 = tpu.matmul %11, %1, %cst_12 {dimension_numbers = #tpu.dot_dimension_numbers<[1], [0], [0], [1], [0, 0, 1, 1], [], []>} : vector<8x128xf32>, vector<128x384xf32>, vector<8x384xf32> -> vector<8x384xf32>
    %18 = arith.addf %17, %5 : vector<8x384xf32>
    %19 = vector.extract_strided_slice %16 {offsets = [0, 0], sizes = [8, 256], strides = [1, 1]} : vector<8x384xf32> to vector<8x256xf32>
    %20 = vector.extract_strided_slice %18 {offsets = [0, 0], sizes = [8, 256], strides = [1, 1]} : vector<8x384xf32> to vector<8x256xf32>
    %21 = arith.addf %19, %20 : vector<8x256xf32>
    %22 = arith.negf %21 : vector<8x256xf32>
    %23 = math.exp %22 : vector<8x256xf32>
    %cst_13 = arith.constant 1.000000e+00 : f32
    %24 = vector.broadcast %cst_13 : f32 to vector<8x256xf32>
    %25 = arith.addf %24, %23 : vector<8x256xf32>
    %26 = arith.divf %24, %25 : vector<8x256xf32>
    %27 = vector.extract_strided_slice %26 {offsets = [0, 0], sizes = [8, 128], strides = [1, 1]} : vector<8x256xf32> to vector<8x128xf32>
    %28 = vector.extract_strided_slice %26 {offsets = [0, 128], sizes = [8, 128], strides = [1, 1]} : vector<8x256xf32> to vector<8x128xf32>
    %29 = vector.extract_strided_slice %16 {offsets = [0, 256], sizes = [8, 128], strides = [1, 1]} : vector<8x384xf32> to vector<8x128xf32>
    %30 = vector.extract_strided_slice %18 {offsets = [0, 256], sizes = [8, 128], strides = [1, 1]} : vector<8x384xf32> to vector<8x128xf32>
    %31 = arith.mulf %27, %30 : vector<8x128xf32>
    %32 = arith.addf %29, %31 : vector<8x128xf32>
    %33 = math.tanh %32 : vector<8x128xf32>
    %34 = arith.subf %11, %33 : vector<8x128xf32>
    %35 = arith.mulf %28, %34 : vector<8x128xf32>
    %36 = arith.addf %33, %35 : vector<8x128xf32>
    %c0_14 = arith.constant 0 : index
    %c0_15 = arith.constant 0 : index
    %37 = vector.load %arg3[%c0_14, %c0_15] : memref<64x128xf32, #tpu.memory_space<vmem>>, vector<8x128xf32>
    tpu.vector_store %arg3[%c0_14, %c0_15], %36 {strides = array<i32>} : memref<64x128xf32, #tpu.memory_space<vmem>>, vector<8x128xf32>,
    %38 = vector.extract_strided_slice %15 {offsets = [8, 0], sizes = [8, 384], strides = [1, 1]} : vector<64x384xf32> to vector<8x384xf32>
    %cst_16 = arith.constant dense<0.000000e+00> : vector<8x384xf32>
    %39 = tpu.matmul %36, %1, %cst_16 {dimension_numbers = #tpu.dot_dimension_numbers<[1], [0], [0], [1], [0, 0, 1, 1], [], []>} : vector<8x128xf32>, vector<128x384xf32>, vector<8x384xf32> -> vector<8x384xf32>
    %40 = arith.addf %39, %5 : vector<8x384xf32>
    %41 = vector.extract_strided_slice %38 {offsets = [0, 0], sizes = [8, 256], strides = [1, 1]} : vector<8x384xf32> to vector<8x256xf32>
    %42 = vector.extract_strided_slice %40 {offsets = [0, 0], sizes = [8, 256], strides = [1, 1]} : vector<8x384xf32> to vector<8x256xf32>
    %43 = arith.addf %41, %42 : vector<8x256xf32>
    %44 = arith.negf %43 : vector<8x256xf32>
    %45 = math.exp %44 : vector<8x256xf32>
    %cst_17 = arith.constant 1.000000e+00 : f32
    %46 = vector.broadcast %cst_17 : f32 to vector<8x256xf32>
    %47 = arith.addf %46, %45 : vector<8x256xf32>
    %48 = arith.divf %46, %47 : vector<8x256xf32>
    %49 = vector.extract_strided_slice %48 {offsets = [0, 0], sizes = [8, 128], strides = [1, 1]} : vector<8x256xf32> to vector<8x128xf32>
    %50 = vector.extract_strided_slice %48 {offsets = [0, 128], sizes = [8, 128], strides = [1, 1]} : vector<8x256xf32> to vector<8x128xf32>
    %51 = vector.extract_strided_slice %38 {offsets = [0, 256], sizes = [8, 128], strides = [1, 1]} : vector<8x384xf32> to vector<8x128xf32>
    %52 = vector.extract_strided_slice %40 {offsets = [0, 256], sizes = [8, 128], strides = [1, 1]} : vector<8x384xf32> to vector<8x128xf32>
    %53 = arith.mulf %49, %52 : vector<8x128xf32>
    %54 = arith.addf %51, %53 : vector<8x128xf32>
    %55 = math.tanh %54 : vector<8x128xf32>
    %56 = arith.subf %36, %55 : vector<8x128xf32>
    %57 = arith.mulf %50, %56 : vector<8x128xf32>
    %58 = arith.addf %55, %57 : vector<8x128xf32>
    %c8 = arith.constant 8 : index
    %c0_18 = arith.constant 0 : index
    %59 = vector.load %arg3[%c8, %c0_18] : memref<64x128xf32, #tpu.memory_space<vmem>>, vector<8x128xf32>
    tpu.vector_store %arg3[%c8, %c0_18], %58 {strides = array<i32>} : memref<64x128xf32, #tpu.memory_space<vmem>>, vector<8x128xf32>,
    %60 = vector.extract_strided_slice %15 {offsets = [16, 0], sizes = [8, 384], strides = [1, 1]} : vector<64x384xf32> to vector<8x384xf32>
    %cst_19 = arith.constant dense<0.000000e+00> : vector<8x384xf32>
    %61 = tpu.matmul %58, %1, %cst_19 {dimension_numbers = #tpu.dot_dimension_numbers<[1], [0], [0], [1], [0, 0, 1, 1], [], []>} : vector<8x128xf32>, vector<128x384xf32>, vector<8x384xf32> -> vector<8x384xf32>
    %62 = arith.addf %61, %5 : vector<8x384xf32>
    %63 = vector.extract_strided_slice %60 {offsets = [0, 0], sizes = [8, 256], strides = [1, 1]} : vector<8x384xf32> to vector<8x256xf32>
    %64 = vector.extract_strided_slice %62 {offsets = [0, 0], sizes = [8, 256], strides = [1, 1]} : vector<8x384xf32> to vector<8x256xf32>
    %65 = arith.addf %63, %64 : vector<8x256xf32>
    %66 = arith.negf %65 : vector<8x256xf32>
    %67 = math.exp %66 : vector<8x256xf32>
    %cst_20 = arith.constant 1.000000e+00 : f32
    %68 = vector.broadcast %cst_20 : f32 to vector<8x256xf32>
    %69 = arith.addf %68, %67 : vector<8x256xf32>
    %70 = arith.divf %68, %69 : vector<8x256xf32>
    %71 = vector.extract_strided_slice %70 {offsets = [0, 0], sizes = [8, 128], strides = [1, 1]} : vector<8x256xf32> to vector<8x128xf32>
    %72 = vector.extract_strided_slice %70 {offsets = [0, 128], sizes = [8, 128], strides = [1, 1]} : vector<8x256xf32> to vector<8x128xf32>
    %73 = vector.extract_strided_slice %60 {offsets = [0, 256], sizes = [8, 128], strides = [1, 1]} : vector<8x384xf32> to vector<8x128xf32>
    %74 = vector.extract_strided_slice %62 {offsets = [0, 256], sizes = [8, 128], strides = [1, 1]} : vector<8x384xf32> to vector<8x128xf32>
    %75 = arith.mulf %71, %74 : vector<8x128xf32>
    %76 = arith.addf %73, %75 : vector<8x128xf32>
    %77 = math.tanh %76 : vector<8x128xf32>
    %78 = arith.subf %58, %77 : vector<8x128xf32>
    %79 = arith.mulf %72, %78 : vector<8x128xf32>
    %80 = arith.addf %77, %79 : vector<8x128xf32>
    %c16 = arith.constant 16 : index
    %c0_21 = arith.constant 0 : index
    %81 = vector.load %arg3[%c16, %c0_21] : memref<64x128xf32, #tpu.memory_space<vmem>>, vector<8x128xf32>
    tpu.vector_store %arg3[%c16, %c0_21], %80 {strides = array<i32>} : memref<64x128xf32, #tpu.memory_space<vmem>>, vector<8x128xf32>,
    %82 = vector.extract_strided_slice %15 {offsets = [24, 0], sizes = [8, 384], strides = [1, 1]} : vector<64x384xf32> to vector<8x384xf32>
    %cst_22 = arith.constant dense<0.000000e+00> : vector<8x384xf32>
    %83 = tpu.matmul %80, %1, %cst_22 {dimension_numbers = #tpu.dot_dimension_numbers<[1], [0], [0], [1], [0, 0, 1, 1], [], []>} : vector<8x128xf32>, vector<128x384xf32>, vector<8x384xf32> -> vector<8x384xf32>
    %84 = arith.addf %83, %5 : vector<8x384xf32>
    %85 = vector.extract_strided_slice %82 {offsets = [0, 0], sizes = [8, 256], strides = [1, 1]} : vector<8x384xf32> to vector<8x256xf32>
    %86 = vector.extract_strided_slice %84 {offsets = [0, 0], sizes = [8, 256], strides = [1, 1]} : vector<8x384xf32> to vector<8x256xf32>
    %87 = arith.addf %85, %86 : vector<8x256xf32>
    %88 = arith.negf %87 : vector<8x256xf32>
    %89 = math.exp %88 : vector<8x256xf32>
    %cst_23 = arith.constant 1.000000e+00 : f32
    %90 = vector.broadcast %cst_23 : f32 to vector<8x256xf32>
    %91 = arith.addf %90, %89 : vector<8x256xf32>
    %92 = arith.divf %90, %91 : vector<8x256xf32>
    %93 = vector.extract_strided_slice %92 {offsets = [0, 0], sizes = [8, 128], strides = [1, 1]} : vector<8x256xf32> to vector<8x128xf32>
    %94 = vector.extract_strided_slice %92 {offsets = [0, 128], sizes = [8, 128], strides = [1, 1]} : vector<8x256xf32> to vector<8x128xf32>
    %95 = vector.extract_strided_slice %82 {offsets = [0, 256], sizes = [8, 128], strides = [1, 1]} : vector<8x384xf32> to vector<8x128xf32>
    %96 = vector.extract_strided_slice %84 {offsets = [0, 256], sizes = [8, 128], strides = [1, 1]} : vector<8x384xf32> to vector<8x128xf32>
    %97 = arith.mulf %93, %96 : vector<8x128xf32>
    %98 = arith.addf %95, %97 : vector<8x128xf32>
    %99 = math.tanh %98 : vector<8x128xf32>
    %100 = arith.subf %80, %99 : vector<8x128xf32>
    %101 = arith.mulf %94, %100 : vector<8x128xf32>
    %102 = arith.addf %99, %101 : vector<8x128xf32>
    %c24 = arith.constant 24 : index
    %c0_24 = arith.constant 0 : index
    %103 = vector.load %arg3[%c24, %c0_24] : memref<64x128xf32, #tpu.memory_space<vmem>>, vector<8x128xf32>
    tpu.vector_store %arg3[%c24, %c0_24], %102 {strides = array<i32>} : memref<64x128xf32, #tpu.memory_space<vmem>>, vector<8x128xf32>,
    %104 = vector.extract_strided_slice %15 {offsets = [32, 0], sizes = [8, 384], strides = [1, 1]} : vector<64x384xf32> to vector<8x384xf32>
    %cst_25 = arith.constant dense<0.000000e+00> : vector<8x384xf32>
    %105 = tpu.matmul %102, %1, %cst_25 {dimension_numbers = #tpu.dot_dimension_numbers<[1], [0], [0], [1], [0, 0, 1, 1], [], []>} : vector<8x128xf32>, vector<128x384xf32>, vector<8x384xf32> -> vector<8x384xf32>
    %106 = arith.addf %105, %5 : vector<8x384xf32>
    %107 = vector.extract_strided_slice %104 {offsets = [0, 0], sizes = [8, 256], strides = [1, 1]} : vector<8x384xf32> to vector<8x256xf32>
    %108 = vector.extract_strided_slice %106 {offsets = [0, 0], sizes = [8, 256], strides = [1, 1]} : vector<8x384xf32> to vector<8x256xf32>
    %109 = arith.addf %107, %108 : vector<8x256xf32>
    %110 = arith.negf %109 : vector<8x256xf32>
    %111 = math.exp %110 : vector<8x256xf32>
    %cst_26 = arith.constant 1.000000e+00 : f32
    %112 = vector.broadcast %cst_26 : f32 to vector<8x256xf32>
    %113 = arith.addf %112, %111 : vector<8x256xf32>
    %114 = arith.divf %112, %113 : vector<8x256xf32>
    %115 = vector.extract_strided_slice %114 {offsets = [0, 0], sizes = [8, 128], strides = [1, 1]} : vector<8x256xf32> to vector<8x128xf32>
    %116 = vector.extract_strided_slice %114 {offsets = [0, 128], sizes = [8, 128], strides = [1, 1]} : vector<8x256xf32> to vector<8x128xf32>
    %117 = vector.extract_strided_slice %104 {offsets = [0, 256], sizes = [8, 128], strides = [1, 1]} : vector<8x384xf32> to vector<8x128xf32>
    %118 = vector.extract_strided_slice %106 {offsets = [0, 256], sizes = [8, 128], strides = [1, 1]} : vector<8x384xf32> to vector<8x128xf32>
    %119 = arith.mulf %115, %118 : vector<8x128xf32>
    %120 = arith.addf %117, %119 : vector<8x128xf32>
    %121 = math.tanh %120 : vector<8x128xf32>
    %122 = arith.subf %102, %121 : vector<8x128xf32>
    %123 = arith.mulf %116, %122 : vector<8x128xf32>
    %124 = arith.addf %121, %123 : vector<8x128xf32>
    %c32 = arith.constant 32 : index
    %c0_27 = arith.constant 0 : index
    %125 = vector.load %arg3[%c32, %c0_27] : memref<64x128xf32, #tpu.memory_space<vmem>>, vector<8x128xf32>
    tpu.vector_store %arg3[%c32, %c0_27], %124 {strides = array<i32>} : memref<64x128xf32, #tpu.memory_space<vmem>>, vector<8x128xf32>,
    %126 = vector.extract_strided_slice %15 {offsets = [40, 0], sizes = [8, 384], strides = [1, 1]} : vector<64x384xf32> to vector<8x384xf32>
    %cst_28 = arith.constant dense<0.000000e+00> : vector<8x384xf32>
    %127 = tpu.matmul %124, %1, %cst_28 {dimension_numbers = #tpu.dot_dimension_numbers<[1], [0], [0], [1], [0, 0, 1, 1], [], []>} : vector<8x128xf32>, vector<128x384xf32>, vector<8x384xf32> -> vector<8x384xf32>
    %128 = arith.addf %127, %5 : vector<8x384xf32>
    %129 = vector.extract_strided_slice %126 {offsets = [0, 0], sizes = [8, 256], strides = [1, 1]} : vector<8x384xf32> to vector<8x256xf32>
    %130 = vector.extract_strided_slice %128 {offsets = [0, 0], sizes = [8, 256], strides = [1, 1]} : vector<8x384xf32> to vector<8x256xf32>
    %131 = arith.addf %129, %130 : vector<8x256xf32>
    %132 = arith.negf %131 : vector<8x256xf32>
    %133 = math.exp %132 : vector<8x256xf32>
    %cst_29 = arith.constant 1.000000e+00 : f32
    %134 = vector.broadcast %cst_29 : f32 to vector<8x256xf32>
    %135 = arith.addf %134, %133 : vector<8x256xf32>
    %136 = arith.divf %134, %135 : vector<8x256xf32>
    %137 = vector.extract_strided_slice %136 {offsets = [0, 0], sizes = [8, 128], strides = [1, 1]} : vector<8x256xf32> to vector<8x128xf32>
    %138 = vector.extract_strided_slice %136 {offsets = [0, 128], sizes = [8, 128], strides = [1, 1]} : vector<8x256xf32> to vector<8x128xf32>
    %139 = vector.extract_strided_slice %126 {offsets = [0, 256], sizes = [8, 128], strides = [1, 1]} : vector<8x384xf32> to vector<8x128xf32>
    %140 = vector.extract_strided_slice %128 {offsets = [0, 256], sizes = [8, 128], strides = [1, 1]} : vector<8x384xf32> to vector<8x128xf32>
    %141 = arith.mulf %137, %140 : vector<8x128xf32>
    %142 = arith.addf %139, %141 : vector<8x128xf32>
    %143 = math.tanh %142 : vector<8x128xf32>
    %144 = arith.subf %124, %143 : vector<8x128xf32>
    %145 = arith.mulf %138, %144 : vector<8x128xf32>
    %146 = arith.addf %143, %145 : vector<8x128xf32>
    %c40 = arith.constant 40 : index
    %c0_30 = arith.constant 0 : index
    %147 = vector.load %arg3[%c40, %c0_30] : memref<64x128xf32, #tpu.memory_space<vmem>>, vector<8x128xf32>
    tpu.vector_store %arg3[%c40, %c0_30], %146 {strides = array<i32>} : memref<64x128xf32, #tpu.memory_space<vmem>>, vector<8x128xf32>,
    %148 = vector.extract_strided_slice %15 {offsets = [48, 0], sizes = [8, 384], strides = [1, 1]} : vector<64x384xf32> to vector<8x384xf32>
    %cst_31 = arith.constant dense<0.000000e+00> : vector<8x384xf32>
    %149 = tpu.matmul %146, %1, %cst_31 {dimension_numbers = #tpu.dot_dimension_numbers<[1], [0], [0], [1], [0, 0, 1, 1], [], []>} : vector<8x128xf32>, vector<128x384xf32>, vector<8x384xf32> -> vector<8x384xf32>
    %150 = arith.addf %149, %5 : vector<8x384xf32>
    %151 = vector.extract_strided_slice %148 {offsets = [0, 0], sizes = [8, 256], strides = [1, 1]} : vector<8x384xf32> to vector<8x256xf32>
    %152 = vector.extract_strided_slice %150 {offsets = [0, 0], sizes = [8, 256], strides = [1, 1]} : vector<8x384xf32> to vector<8x256xf32>
    %153 = arith.addf %151, %152 : vector<8x256xf32>
    %154 = arith.negf %153 : vector<8x256xf32>
    %155 = math.exp %154 : vector<8x256xf32>
    %cst_32 = arith.constant 1.000000e+00 : f32
    %156 = vector.broadcast %cst_32 : f32 to vector<8x256xf32>
    %157 = arith.addf %156, %155 : vector<8x256xf32>
    %158 = arith.divf %156, %157 : vector<8x256xf32>
    %159 = vector.extract_strided_slice %158 {offsets = [0, 0], sizes = [8, 128], strides = [1, 1]} : vector<8x256xf32> to vector<8x128xf32>
    %160 = vector.extract_strided_slice %158 {offsets = [0, 128], sizes = [8, 128], strides = [1, 1]} : vector<8x256xf32> to vector<8x128xf32>
    %161 = vector.extract_strided_slice %148 {offsets = [0, 256], sizes = [8, 128], strides = [1, 1]} : vector<8x384xf32> to vector<8x128xf32>
    %162 = vector.extract_strided_slice %150 {offsets = [0, 256], sizes = [8, 128], strides = [1, 1]} : vector<8x384xf32> to vector<8x128xf32>
    %163 = arith.mulf %159, %162 : vector<8x128xf32>
    %164 = arith.addf %161, %163 : vector<8x128xf32>
    %165 = math.tanh %164 : vector<8x128xf32>
    %166 = arith.subf %146, %165 : vector<8x128xf32>
    %167 = arith.mulf %160, %166 : vector<8x128xf32>
    %168 = arith.addf %165, %167 : vector<8x128xf32>
    %c48 = arith.constant 48 : index
    %c0_33 = arith.constant 0 : index
    %169 = vector.load %arg3[%c48, %c0_33] : memref<64x128xf32, #tpu.memory_space<vmem>>, vector<8x128xf32>
    tpu.vector_store %arg3[%c48, %c0_33], %168 {strides = array<i32>} : memref<64x128xf32, #tpu.memory_space<vmem>>, vector<8x128xf32>,
    %170 = vector.extract_strided_slice %15 {offsets = [56, 0], sizes = [8, 384], strides = [1, 1]} : vector<64x384xf32> to vector<8x384xf32>
    %cst_34 = arith.constant dense<0.000000e+00> : vector<8x384xf32>
    %171 = tpu.matmul %168, %1, %cst_34 {dimension_numbers = #tpu.dot_dimension_numbers<[1], [0], [0], [1], [0, 0, 1, 1], [], []>} : vector<8x128xf32>, vector<128x384xf32>, vector<8x384xf32> -> vector<8x384xf32>
    %172 = arith.addf %171, %5 : vector<8x384xf32>
    %173 = vector.extract_strided_slice %170 {offsets = [0, 0], sizes = [8, 256], strides = [1, 1]} : vector<8x384xf32> to vector<8x256xf32>
    %174 = vector.extract_strided_slice %172 {offsets = [0, 0], sizes = [8, 256], strides = [1, 1]} : vector<8x384xf32> to vector<8x256xf32>
    %175 = arith.addf %173, %174 : vector<8x256xf32>
    %176 = arith.negf %175 : vector<8x256xf32>
    %177 = math.exp %176 : vector<8x256xf32>
    %cst_35 = arith.constant 1.000000e+00 : f32
    %178 = vector.broadcast %cst_35 : f32 to vector<8x256xf32>
    %179 = arith.addf %178, %177 : vector<8x256xf32>
    %180 = arith.divf %178, %179 : vector<8x256xf32>
    %181 = vector.extract_strided_slice %180 {offsets = [0, 0], sizes = [8, 128], strides = [1, 1]} : vector<8x256xf32> to vector<8x128xf32>
    %182 = vector.extract_strided_slice %180 {offsets = [0, 128], sizes = [8, 128], strides = [1, 1]} : vector<8x256xf32> to vector<8x128xf32>
    %183 = vector.extract_strided_slice %170 {offsets = [0, 256], sizes = [8, 128], strides = [1, 1]} : vector<8x384xf32> to vector<8x128xf32>
    %184 = vector.extract_strided_slice %172 {offsets = [0, 256], sizes = [8, 128], strides = [1, 1]} : vector<8x384xf32> to vector<8x128xf32>
    %185 = arith.mulf %181, %184 : vector<8x128xf32>
    %186 = arith.addf %183, %185 : vector<8x128xf32>
    %187 = math.tanh %186 : vector<8x128xf32>
    %188 = arith.subf %168, %187 : vector<8x128xf32>
    %189 = arith.mulf %182, %188 : vector<8x128xf32>
    %190 = arith.addf %187, %189 : vector<8x128xf32>
    %c56 = arith.constant 56 : index
    %c0_36 = arith.constant 0 : index
    %191 = vector.load %arg3[%c56, %c0_36] : memref<64x128xf32, #tpu.memory_space<vmem>>, vector<8x128xf32>
    tpu.vector_store %arg3[%c56, %c0_36], %190 {strides = array<i32>} : memref<64x128xf32, #tpu.memory_space<vmem>>, vector<8x128xf32>,
    %c0_37 = arith.constant 0 : index
    %c0_38 = arith.constant 0 : index
    %192 = vector.load %arg3[%c0_37, %c0_38] : memref<64x128xf32, #tpu.memory_space<vmem>>, vector<64x128xf32>
    %cst_39 = arith.constant dense<0.000000e+00> : vector<64x128xf32>
    %193 = tpu.matmul %192, %3, %cst_39 {dimension_numbers = #tpu.dot_dimension_numbers<[1], [0], [0], [1], [0, 0, 1, 1], [], []>} : vector<64x128xf32>, vector<128x128xf32>, vector<64x128xf32> -> vector<64x128xf32>
    %194 = vector.extract_strided_slice %193 {offsets = [0, 0], sizes = [8, 128], strides = [1, 1]} : vector<64x128xf32> to vector<8x128xf32>
    %195 = arith.addf %194, %7 : vector<8x128xf32>
    %c0_40 = arith.constant 0 : index
    %c0_41 = arith.constant 0 : index
    %196 = vector.load %arg2[%c0_40, %c0_41] : memref<64x128xf32, #tpu.memory_space<vmem>>, vector<8x128xf32>
    tpu.vector_store %arg2[%c0_40, %c0_41], %195 {strides = array<i32>} : memref<64x128xf32, #tpu.memory_space<vmem>>, vector<8x128xf32>,
    %197 = vector.extract_strided_slice %193 {offsets = [8, 0], sizes = [8, 128], strides = [1, 1]} : vector<64x128xf32> to vector<8x128xf32>
    %198 = arith.addf %195, %197 : vector<8x128xf32>
    %199 = arith.addf %198, %7 : vector<8x128xf32>
    %c8_42 = arith.constant 8 : index
    %c0_43 = arith.constant 0 : index
    %200 = vector.load %arg2[%c8_42, %c0_43] : memref<64x128xf32, #tpu.memory_space<vmem>>, vector<8x128xf32>
    tpu.vector_store %arg2[%c8_42, %c0_43], %199 {strides = array<i32>} : memref<64x128xf32, #tpu.memory_space<vmem>>, vector<8x128xf32>,
    %201 = vector.extract_strided_slice %193 {offsets = [16, 0], sizes = [8, 128], strides = [1, 1]} : vector<64x128xf32> to vector<8x128xf32>
    %202 = arith.addf %199, %201 : vector<8x128xf32>
    %203 = arith.addf %202, %7 : vector<8x128xf32>
    %c16_44 = arith.constant 16 : index
    %c0_45 = arith.constant 0 : index
    %204 = vector.load %arg2[%c16_44, %c0_45] : memref<64x128xf32, #tpu.memory_space<vmem>>, vector<8x128xf32>
    tpu.vector_store %arg2[%c16_44, %c0_45], %203 {strides = array<i32>} : memref<64x128xf32, #tpu.memory_space<vmem>>, vector<8x128xf32>,
    %205 = vector.extract_strided_slice %193 {offsets = [24, 0], sizes = [8, 128], strides = [1, 1]} : vector<64x128xf32> to vector<8x128xf32>
    %206 = arith.addf %203, %205 : vector<8x128xf32>
    %207 = arith.addf %206, %7 : vector<8x128xf32>
    %c24_46 = arith.constant 24 : index
    %c0_47 = arith.constant 0 : index
    %208 = vector.load %arg2[%c24_46, %c0_47] : memref<64x128xf32, #tpu.memory_space<vmem>>, vector<8x128xf32>
    tpu.vector_store %arg2[%c24_46, %c0_47], %207 {strides = array<i32>} : memref<64x128xf32, #tpu.memory_space<vmem>>, vector<8x128xf32>,
    %209 = vector.extract_strided_slice %193 {offsets = [32, 0], sizes = [8, 128], strides = [1, 1]} : vector<64x128xf32> to vector<8x128xf32>
    %210 = arith.addf %207, %209 : vector<8x128xf32>
    %211 = arith.addf %210, %7 : vector<8x128xf32>
    %c32_48 = arith.constant 32 : index
    %c0_49 = arith.constant 0 : index
    %212 = vector.load %arg2[%c32_48, %c0_49] : memref<64x128xf32, #tpu.memory_space<vmem>>, vector<8x128xf32>
    tpu.vector_store %arg2[%c32_48, %c0_49], %211 {strides = array<i32>} : memref<64x128xf32, #tpu.memory_space<vmem>>, vector<8x128xf32>,
    %213 = vector.extract_strided_slice %193 {offsets = [40, 0], sizes = [8, 128], strides = [1, 1]} : vector<64x128xf32> to vector<8x128xf32>
    %214 = arith.addf %211, %213 : vector<8x128xf32>
    %215 = arith.addf %214, %7 : vector<8x128xf32>
    %c40_50 = arith.constant 40 : index
    %c0_51 = arith.constant 0 : index
    %216 = vector.load %arg2[%c40_50, %c0_51] : memref<64x128xf32, #tpu.memory_space<vmem>>, vector<8x128xf32>
    tpu.vector_store %arg2[%c40_50, %c0_51], %215 {strides = array<i32>} : memref<64x128xf32, #tpu.memory_space<vmem>>, vector<8x128xf32>,
    %217 = vector.extract_strided_slice %193 {offsets = [48, 0], sizes = [8, 128], strides = [1, 1]} : vector<64x128xf32> to vector<8x128xf32>
    %218 = arith.addf %215, %217 : vector<8x128xf32>
    %219 = arith.addf %218, %7 : vector<8x128xf32>
    %c48_52 = arith.constant 48 : index
    %c0_53 = arith.constant 0 : index
    %220 = vector.load %arg2[%c48_52, %c0_53] : memref<64x128xf32, #tpu.memory_space<vmem>>, vector<8x128xf32>
    tpu.vector_store %arg2[%c48_52, %c0_53], %219 {strides = array<i32>} : memref<64x128xf32, #tpu.memory_space<vmem>>, vector<8x128xf32>,
    %221 = vector.extract_strided_slice %193 {offsets = [56, 0], sizes = [8, 128], strides = [1, 1]} : vector<64x128xf32> to vector<8x128xf32>
    %222 = arith.addf %219, %221 : vector<8x128xf32>
    %223 = arith.addf %222, %7 : vector<8x128xf32>
    %c56_54 = arith.constant 56 : index
    %c0_55 = arith.constant 0 : index
    %224 = vector.load %arg2[%c56_54, %c0_55] : memref<64x128xf32, #tpu.memory_space<vmem>>, vector<8x128xf32>
    tpu.vector_store %arg2[%c56_54, %c0_55], %223 {strides = array<i32>} : memref<64x128xf32, #tpu.memory_space<vmem>>, vector<8x128xf32>,
    return
  }
}

</mosaic_0001>

<llo_original>
// kernel: gru_waypoints_predictor.1
$region0: #{gru_waypoints_predictor.1}
  #allocation0 [shape = 'u32[]', space=smem, size = 0x4, offset = 0x4, fixed_abs, tag = 'smem constant byte address 0x4 - core index']
  #allocation1 [shape = 'u32[144,128]{1,0:T(1,128)}', space=vmem, size = 0x12000, scoped, tag = 'internal scratch']
  #allocation2 [shape = 'f32[64,128]{1,0:T(8,128)}', space=vmem, size = 0x8000, scoped, tag = 'scratch operand']
  %s0 = inlined_call_operand.vmem [shape: f32[72,128], index: 0, kind: input, shape index: {}]
  %s1 = inlined_call_operand.hbm [shape: f32[544,384], index: 1, kind: input, shape index: {}]
  %s2 = inlined_call_operand.vmem [shape: f32[64,128], index: 2, kind: output, shape index: {}]
  %s3 = sld [smem:[#allocation0]]
  $region22: #{gru_waypoints_predictor.1} parent=0
    _
  %s5 = ssub.s32 1, %s3
  %s6 = scalar_select 0, %s5, %s3
  $region1: #{gru_waypoints_predictor.1} parent=0
    #allocation3 [shape = 'u8[835584]{0}', space=vmem, size = 0xcc000, scoped, tag = 'input window, operand 1, single buffered']
    #allocation4 [shape = 's32[1]{0}', space=sflag, size = 0x4, scoped, tag = 'scoped memory for gru_waypoints_predictor.1']
    %7 = vsyncpa [#allocation4], 0
    // Predicated region
    $region2: #{gru_waypoints_predictor.1} parent=1 // pred_check
      _
    $region3: #{gru_waypoints_predictor.1} parent=1 // pred_check_branch
      %9 = sbr.rel (0) target = $region5
    $region4: #{gru_waypoints_predictor.1} parent=1 // pred_region
      _
    $region5: #{gru_waypoints_predictor.1} parent=1 // pred_fallthru
      _
    // Predicated region
    $region6: #{gru_waypoints_predictor.1} parent=1 // pred_check
      _
    $region7: #{gru_waypoints_predictor.1} parent=1 // pred_check_branch
      %11 = sbr.rel (0) target = $region9
    $region8: #{gru_waypoints_predictor.1} parent=1 // pred_region
      %s13 = ssub.s32 26112, 26112
      %14 = vsyncadd [#allocation4], %s13
      %s15 = sshll.u32 [#allocation3], 4
      %s16 = int_to_ptr.vmem [resolvable:$true] %s15
      %21 = dma.hbm_to_vmem [thread:$0]  %s1, 26112, %s16, [#allocation4], 384, 384, 24
    $region9: #{gru_waypoints_predictor.1} parent=1 // pred_fallthru
      _
    // Predicated region
    $region10: #{gru_waypoints_predictor.1} parent=1 // pred_check
      _
    $region11: #{gru_waypoints_predictor.1} parent=1 // pred_check_branch
      %23 = sbr.rel (0) target = $region13
    $region12: #{gru_waypoints_predictor.1} parent=1 // pred_region
      %24 = dma.done [#allocation4], 26112
    $region13: #{gru_waypoints_predictor.1} parent=1 // pred_fallthru
      _
    %v25 = vld [vmem:[#allocation3] sm:$0xff]
    %v26 = vld [vmem:[#allocation3 + $0x8] sm:$0xff]
    %v27 = vld [vmem:[#allocation3 + $0x10] sm:$0xff]
    %v28 = vld [vmem:[#allocation3 + $0x18] sm:$0xff]
    %v29 = vld [vmem:[#allocation3 + $0x20] sm:$0xff]
    %v30 = vld [vmem:[#allocation3 + $0x28] sm:$0xff]
    %v31 = vld [vmem:[#allocation3 + $0x30] sm:$0xff]
    %v32 = vld [vmem:[#allocation3 + $0x38] sm:$0xff]
    %v33 = vld [vmem:[#allocation3 + $0x40] sm:$0xff]
    %v34 = vld [vmem:[#allocation3 + $0x48] sm:$0xff]
    %v35 = vld [vmem:[#allocation3 + $0x50] sm:$0xff]
    %v36 = vld [vmem:[#allocation3 + $0x58] sm:$0xff]
    %v37 = vld [vmem:[#allocation3 + $0x60] sm:$0xff]
    %v38 = vld [vmem:[#allocation3 + $0x68] sm:$0xff]
    %v39 = vld [vmem:[#allocation3 + $0x70] sm:$0xff]
    %v40 = vld [vmem:[#allocation3 + $0x78] sm:$0xff]
    %v41 = vld [vmem:[#allocation3 + $0x80] sm:$0xff]
    %v42 = vld [vmem:[#allocation3 + $0x88] sm:$0xff]
    %v43 = vld [vmem:[#allocation3 + $0x90] sm:$0xff]
    %v44 = vld [vmem:[#allocation3 + $0x98] sm:$0xff]
    %v45 = vld [vmem:[#allocation3 + $0xa0] sm:$0xff]
    %v46 = vld [vmem:[#allocation3 + $0xa8] sm:$0xff]
    %v47 = vld [vmem:[#allocation3 + $0xb0] sm:$0xff]
    %v48 = vld [vmem:[#allocation3 + $0xb8] sm:$0xff]
    %v49 = vld [vmem:[#allocation3 + $0xc0] sm:$0xff]
    %v50 = vld [vmem:[#allocation3 + $0xc8] sm:$0xff]
    %v51 = vld [vmem:[#allocation3 + $0xd0] sm:$0xff]
    %v52 = vld [vmem:[#allocation3 + $0xd8] sm:$0xff]
    %v53 = vld [vmem:[#allocation3 + $0xe0] sm:$0xff]
    %v54 = vld [vmem:[#allocation3 + $0xe8] sm:$0xff]
    %v55 = vld [vmem:[#allocation3 + $0xf0] sm:$0xff]
    %v56 = vld [vmem:[#allocation3 + $0xf8] sm:$0xff]
    %v57 = vld [vmem:[#allocation3 + $0x100] sm:$0xff]
    %v58 = vld [vmem:[#allocation3 + $0x108] sm:$0xff]
    %v59 = vld [vmem:[#allocation3 + $0x110] sm:$0xff]
    %v60 = vld [vmem:[#allocation3 + $0x118] sm:$0xff]
    %v61 = vld [vmem:[#allocation3 + $0x120] sm:$0xff]
    %v62 = vld [vmem:[#allocation3 + $0x128] sm:$0xff]
    %v63 = vld [vmem:[#allocation3 + $0x130] sm:$0xff]
    %v64 = vld [vmem:[#allocation3 + $0x138] sm:$0xff]
    %v65 = vld [vmem:[#allocation3 + $0x140] sm:$0xff]
    %v66 = vld [vmem:[#allocation3 + $0x148] sm:$0xff]
    %v67 = vld [vmem:[#allocation3 + $0x150] sm:$0xff]
    %v68 = vld [vmem:[#allocation3 + $0x158] sm:$0xff]
    %v69 = vld [vmem:[#allocation3 + $0x160] sm:$0xff]
    %v70 = vld [vmem:[#allocation3 + $0x168] sm:$0xff]
    %v71 = vld [vmem:[#allocation3 + $0x170] sm:$0xff]
    %v72 = vld [vmem:[#allocation3 + $0x178] sm:$0xff]
    %v73 = vld [vmem:[#allocation3 + $0x180] sm:$0xff]
    %v74 = vld [vmem:[#allocation3 + $0x188] sm:$0xff]
    %v75 = vld [vmem:[#allocation3 + $0x190] sm:$0xff]
    %v76 = vld [vmem:[#allocation3 + $0x198] sm:$0xff]
    %v77 = vld [vmem:[#allocation3 + $0x1a0] sm:$0xff]
    %v78 = vld [vmem:[#allocation3 + $0x1a8] sm:$0xff]
    %v79 = vld [vmem:[#allocation3 + $0x1b0] sm:$0xff]
    %v80 = vld [vmem:[#allocation3 + $0x1b8] sm:$0xff]
    %v81 = vld [vmem:[#allocation3 + $0x1c0] sm:$0xff]
    %v82 = vld [vmem:[#allocation3 + $0x1c8] sm:$0xff]
    %v83 = vld [vmem:[#allocation3 + $0x1d0] sm:$0xff]
    %v84 = vld [vmem:[#allocation3 + $0x1d8] sm:$0xff]
    %v85 = vld [vmem:[#allocation3 + $0x1e0] sm:$0xff]
    %v86 = vld [vmem:[#allocation3 + $0x1e8] sm:$0xff]
    %v87 = vld [vmem:[#allocation3 + $0x1f0] sm:$0xff]
    %v88 = vld [vmem:[#allocation3 + $0x1f8] sm:$0xff]
    %v89 = vld [vmem:[#allocation3 + $0x200] sm:$0xff]
    %v90 = vld [vmem:[#allocation3 + $0x208] sm:$0xff]
    %v91 = vld [vmem:[#allocation3 + $0x210] sm:$0xff]
    %v92 = vld [vmem:[#allocation3 + $0x218] sm:$0xff]
    %v93 = vld [vmem:[#allocation3 + $0x220] sm:$0xff]
    %v94 = vld [vmem:[#allocation3 + $0x228] sm:$0xff]
    %v95 = vld [vmem:[#allocation3 + $0x230] sm:$0xff]
    %v96 = vld [vmem:[#allocation3 + $0x238] sm:$0xff]
    %v97 = vld [vmem:[#allocation3 + $0x240] sm:$0xff]
    %v98 = vld [vmem:[#allocation3 + $0x248] sm:$0xff]
    %v99 = vld [vmem:[#allocation3 + $0x250] sm:$0xff]
    %v100 = vld [vmem:[#allocation3 + $0x258] sm:$0xff]
    %v101 = vld [vmem:[#allocation3 + $0x260] sm:$0xff]
    %v102 = vld [vmem:[#allocation3 + $0x268] sm:$0xff]
    %v103 = vld [vmem:[#allocation3 + $0x270] sm:$0xff]
    %v104 = vld [vmem:[#allocation3 + $0x278] sm:$0xff]
    %v105 = vld [vmem:[#allocation3 + $0x280] sm:$0xff]
    %v106 = vld [vmem:[#allocation3 + $0x288] sm:$0xff]
    %v107 = vld [vmem:[#allocation3 + $0x290] sm:$0xff]
    %v108 = vld [vmem:[#allocation3 + $0x298] sm:$0xff]
    %v109 = vld [vmem:[#allocation3 + $0x2a0] sm:$0xff]
    %v110 = vld [vmem:[#allocation3 + $0x2a8] sm:$0xff]
    %v111 = vld [vmem:[#allocation3 + $0x2b0] sm:$0xff]
    %v112 = vld [vmem:[#allocation3 + $0x2b8] sm:$0xff]
    %v113 = vld [vmem:[#allocation3 + $0x2c0] sm:$0xff]
    %v114 = vld [vmem:[#allocation3 + $0x2c8] sm:$0xff]
    %v115 = vld [vmem:[#allocation3 + $0x2d0] sm:$0xff]
    %v116 = vld [vmem:[#allocation3 + $0x2d8] sm:$0xff]
    %v117 = vld [vmem:[#allocation3 + $0x2e0] sm:$0xff]
    %v118 = vld [vmem:[#allocation3 + $0x2e8] sm:$0xff]
    %v119 = vld [vmem:[#allocation3 + $0x2f0] sm:$0xff]
    %v120 = vld [vmem:[#allocation3 + $0x2f8] sm:$0xff]
    %v121 = vld [vmem:[#allocation3 + $0x300] sm:$0xff]
    %v122 = vld [vmem:[#allocation3 + $0x318] sm:$0xff]
    %v123 = vld [vmem:[#allocation3 + $0x330] sm:$0xff]
    %v124 = vld [vmem:[#allocation3 + $0x348] sm:$0xff]
    %v125 = vld [vmem:[#allocation3 + $0x360] sm:$0xff]
    %v126 = vld [vmem:[#allocation3 + $0x378] sm:$0xff]
    %v127 = vld [vmem:[#allocation3 + $0x390] sm:$0xff]
    %v128 = vld [vmem:[#allocation3 + $0x3a8] sm:$0xff]
    %v129 = vld [vmem:[#allocation3 + $0x3c0] sm:$0xff]
    %v130 = vld [vmem:[#allocation3 + $0x3d8] sm:$0xff]
    %v131 = vld [vmem:[#allocation3 + $0x3f0] sm:$0xff]
    %v132 = vld [vmem:[#allocation3 + $0x408] sm:$0xff]
    %v133 = vld [vmem:[#allocation3 + $0x420] sm:$0xff]
    %v134 = vld [vmem:[#allocation3 + $0x438] sm:$0xff]
    %v135 = vld [vmem:[#allocation3 + $0x450] sm:$0xff]
    %v136 = vld [vmem:[#allocation3 + $0x468] sm:$0xff]
    %v137 = vld [vmem:[#allocation3 + $0x480] sm:$0xff]
    %v138 = vld [vmem:[#allocation3 + $0x498] sm:$0xff]
    %v139 = vld [vmem:[#allocation3 + $0x4b0] sm:$0xff]
    %v140 = vld [vmem:[#allocation3 + $0x4c8] sm:$0xff]
    %v141 = vld [vmem:[#allocation3 + $0x4e0] sm:$0xff]
    %v142 = vld [vmem:[#allocation3 + $0x4f8] sm:$0xff]
    %v143 = vld [vmem:[#allocation3 + $0x510] sm:$0xff]
    %v144 = vld [vmem:[#allocation3 + $0x528] sm:$0xff]
    %v145 = vld [vmem:[#allocation3 + $0x540] sm:$0xff]
    %v146 = vld [vmem:[#allocation3 + $0x558] sm:$0xff]
    %v147 = vld [vmem:[#allocation3 + $0x570] sm:$0xff]
    %v148 = vld [vmem:[#allocation3 + $0x588] sm:$0xff]
    %v149 = vld [vmem:[#allocation3 + $0x5a0] sm:$0xff]
    %v150 = vld [vmem:[#allocation3 + $0x5b8] sm:$0xff]
    %v151 = vld [vmem:[#allocation3 + $0x5d0] sm:$0xff]
    %v152 = vld [vmem:[#allocation3 + $0x5e8] sm:$0xff]
    %s153 = scalar_lea.vmem [#allocation3], 1536
    %v154 = vld [vmem:[%s153] ss:$8 sm:$0x7]
    %v155 = vld [vmem:[#allocation3 + $0x618] sm:$0xff]
    %v156 = vld [vmem:[#allocation3 + $0x620] sm:$0xff]
    %v157 = vld [vmem:[#allocation3 + $0x628] sm:$0xff]
    %v158 = vld [vmem:[#allocation3 + $0x630] sm:$0xff]
    %v159 = vld [vmem:[#allocation3 + $0x648] sm:$0xff]
    %v160 = vld [vmem:[%s0] sm:$0xff]
    %v161 = vld [vmem:[%s0 + $0x8] sm:$0xff]
    %v162 = vld [vmem:[%s0 + $0x10] sm:$0xff]
    %v163 = vld [vmem:[%s0 + $0x18] sm:$0xff]
    %v164 = vld [vmem:[%s0 + $0x20] sm:$0xff]
    %v165 = vld [vmem:[%s0 + $0x28] sm:$0xff]
    %v166 = vld [vmem:[%s0 + $0x30] sm:$0xff]
    %v167 = vld [vmem:[%s0 + $0x38] sm:$0xff]
    %v168 = vld [vmem:[%s0 + $0x40] sm:$0xff]
    %169 = vmatprep.subr.mxu0 0.0
    %170 = vmatpush1.msra.mxu0 %v121
    %171 = vmatprep.subr.mxu0 0.0
    %172 = vmatpush1.msra.mxu0 %v122
    %173 = vmatprep.subr.mxu0 0.0
    %174 = vmatpush1.msra.mxu0 %v123
    %175 = vmatprep.subr.mxu0 0.0
    %176 = vmatpush1.msra.mxu0 %v124
    %177 = vmatprep.subr.mxu0 0.0
    %178 = vmatpush1.msra.mxu0 %v125
    %179 = vmatprep.subr.mxu0 0.0
    %180 = vmatpush1.msra.mxu0 %v126
    %181 = vmatprep.subr.mxu0 0.0
    %182 = vmatpush1.msra.mxu0 %v127
    %183 = vmatprep.subr.mxu0 0.0
    %184 = vmatpush1.msra.mxu0 %v128
    %185 = vmatprep.subr.mxu0 0.0
    %186 = vmatpush1.msra.mxu0 %v129
    %187 = vmatprep.subr.mxu0 0.0
    %188 = vmatpush1.msra.mxu0 %v130
    %189 = vmatprep.subr.mxu0 0.0
    %190 = vmatpush1.msra.mxu0 %v131
    %191 = vmatprep.subr.mxu0 0.0
    %192 = vmatpush1.msra.mxu0 %v132
    %193 = vmatprep.subr.mxu0 0.0
    %194 = vmatpush1.msra.mxu0 %v133
    %195 = vmatprep.subr.mxu0 0.0
    %196 = vmatpush1.msra.mxu0 %v134
    %197 = vmatprep.subr.mxu0 0.0
    %198 = vmatpush1.msra.mxu0 %v135
    %199 = vmatprep.subr.mxu0 0.0
    %200 = vmatpush1.msra.mxu0 %v136
    %201 = vmatprep.subr.mxu0 0.0
    %202 = vmatpush1.msra.mxu0 0.0
    %203 = vmatprep.subr.mxu0 0.0
    %204 = vmatpush1.msra.mxu0 0.0
    %205 = vmatprep.subr.mxu0 0.0
    %206 = vmatpush1.msra.mxu0 0.0
    %207 = vmatprep.subr.mxu0 0.0
    %208 = vmatpush1.msra.mxu0 0.0
    %209 = vmatprep.subr.mxu0 0.0
    %210 = vmatpush1.msra.mxu0 0.0
    %211 = vmatprep.subr.mxu0 0.0
    %212 = vmatpush1.msra.mxu0 0.0
    %213 = vmatprep.subr.mxu0 0.0
    %214 = vmatpush1.msra.mxu0 0.0
    %215 = vmatprep.subr.mxu0 0.0
    %216 = vmatpush1.msra.mxu0 0.0
    %217 = vmatprep.subr.mxu0 0.0
    %218 = vmatpush1.msra.mxu0 0.0
    %219 = vmatprep.subr.mxu0 0.0
    %220 = vmatpush1.msra.mxu0 0.0
    %221 = vmatprep.subr.mxu0 0.0
    %222 = vmatpush1.msra.mxu0 0.0
    %223 = vmatprep.subr.mxu0 0.0
    %224 = vmatpush1.msra.mxu0 0.0
    %225 = vmatprep.subr.mxu0 0.0
    %226 = vmatpush1.msra.mxu0 0.0
    %227 = vmatprep.subr.mxu0 0.0
    %228 = vmatpush1.msra.mxu0 0.0
    %229 = vmatprep.subr.mxu0 0.0
    %230 = vmatpush1.msra.mxu0 0.0
    %231 = vmatprep.subr.mxu0 0.0
    %232 = vmatpush1.msra.mxu0 0.0
    %233 = vmatprep.mubr.f32.mxu0 0.0
    %234 = vmatmul.mubr.f32.gmra.mrb[0].mxu0 %v168
    %v235 = vpop.f32.mrb[0].mxu0
    %v236 = vadd.f32 %v158, %v235
    %v237 = vpop.f32.mrb[0].mxu0
    %238 = vdwg.mxu0
    %v240 = vlaneseq
    %v241 = vshrl.u32 %v240, 7
    %v242 = vsub.s32 0, %v241
    %v243 = vrot.slane %v154, %v242
    %v244 = vlaneseq
    %v245 = vshrl.u32 %v244, 7
    %v246 = vsub.s32 1, %v245
    %v247 = vrot.slane %v154, %v246
    %v248 = vlaneseq
    %v249 = vshrl.u32 %v248, 7
    %v250 = vsub.s32 2, %v249
    %v251 = vrot.slane %v154, %v250
    %255 = vmatprep.subr.mxu0 %v26
    %256 = vmatpush1.msra.mxu0 %v25
    %257 = vmatprep.subr.mxu0 %v29
    %258 = vmatpush1.msra.mxu0 %v28
    %259 = vmatprep.subr.mxu0 %v32
    %260 = vmatpush1.msra.mxu0 %v31
    %261 = vmatprep.subr.mxu0 %v35
    %262 = vmatpush1.msra.mxu0 %v34
    %263 = vmatprep.subr.mxu0 %v38
    %264 = vmatpush1.msra.mxu0 %v37
    %265 = vmatprep.subr.mxu0 %v41
    %266 = vmatpush1.msra.mxu0 %v40
    %267 = vmatprep.subr.mxu0 %v44
    %268 = vmatpush1.msra.mxu0 %v43
    %269 = vmatprep.subr.mxu0 %v47
    %270 = vmatpush1.msra.mxu0 %v46
    %271 = vmatprep.subr.mxu0 %v50
    %272 = vmatpush1.msra.mxu0 %v49
    %273 = vmatprep.subr.mxu0 %v53
    %274 = vmatpush1.msra.mxu0 %v52
    %275 = vmatprep.subr.mxu0 %v56
    %276 = vmatpush1.msra.mxu0 %v55
    %277 = vmatprep.subr.mxu0 %v59
    %278 = vmatpush1.msra.mxu0 %v58
    %279 = vmatprep.subr.mxu0 %v62
    %280 = vmatpush1.msra.mxu0 %v61
    %281 = vmatprep.subr.mxu0 %v65
    %282 = vmatpush1.msra.mxu0 %v64
    %283 = vmatprep.subr.mxu0 %v68
    %284 = vmatpush1.msra.mxu0 %v67
    %285 = vmatprep.subr.mxu0 %v71
    %286 = vmatpush1.msra.mxu0 %v70
    %287 = vmatprep.subr.mxu0 0.0
    %288 = vmatpush1.msra.mxu0 0.0
    %289 = vmatprep.subr.mxu0 0.0
    %290 = vmatpush1.msra.mxu0 0.0
    %291 = vmatprep.subr.mxu0 0.0
    %292 = vmatpush1.msra.mxu0 0.0
    %293 = vmatprep.subr.mxu0 0.0
    %294 = vmatpush1.msra.mxu0 0.0
    %295 = vmatprep.subr.mxu0 0.0
    %296 = vmatpush1.msra.mxu0 0.0
    %297 = vmatprep.subr.mxu0 0.0
    %298 = vmatpush1.msra.mxu0 0.0
    %299 = vmatprep.subr.mxu0 0.0
    %300 = vmatpush1.msra.mxu0 0.0
    %301 = vmatprep.subr.mxu0 0.0
    %302 = vmatpush1.msra.mxu0 0.0
    %303 = vmatprep.subr.mxu0 0.0
    %304 = vmatpush1.msra.mxu0 0.0
    %305 = vmatprep.subr.mxu0 0.0
    %306 = vmatpush1.msra.mxu0 0.0
    %307 = vmatprep.subr.mxu0 0.0
    %308 = vmatpush1.msra.mxu0 0.0
    %309 = vmatprep.subr.mxu0 0.0
    %310 = vmatpush1.msra.mxu0 0.0
    %311 = vmatprep.subr.mxu0 0.0
    %312 = vmatpush1.msra.mxu0 0.0
    %313 = vmatprep.subr.mxu0 0.0
    %314 = vmatpush1.msra.mxu0 0.0
    %315 = vmatprep.subr.mxu0 0.0
    %316 = vmatpush1.msra.mxu0 0.0
    %317 = vmatprep.subr.mxu0 0.0
    %318 = vmatpush1.msra.mxu0 0.0
    %319 = vmatprep.mubr.f32.mxu0 0.0
    %320 = vmatmul.mubr.f32.gmra.mrb[0].mxu0 %v160
    %v321 = vpop.f32.mrb[0].mxu0
    %v322 = vadd.f32 %v243, %v321
    %v323 = vpop.f32.mrb[0].mxu0
    %v324 = vadd.f32 %v247, %v323
    %325 = vmatprep.mubr.f32.mxu0 0.0
    %326 = vmatmul.mubr.f32.gmra.mrb[0].mxu0 %v161
    %v327 = vpop.f32.mrb[0].mxu0
    %v328 = vadd.f32 %v243, %v327
    %v329 = vpop.f32.mrb[0].mxu0
    %v330 = vadd.f32 %v247, %v329
    %331 = vmatprep.mubr.f32.mxu0 0.0
    %332 = vmatmul.mubr.f32.gmra.mrb[0].mxu0 %v162
    %v333 = vpop.f32.mrb[0].mxu0
    %v334 = vadd.f32 %v243, %v333
    %v335 = vpop.f32.mrb[0].mxu0
    %v336 = vadd.f32 %v247, %v335
    %337 = vmatprep.mubr.f32.mxu0 0.0
    %338 = vmatmul.mubr.f32.gmra.mrb[0].mxu0 %v163
    %v339 = vpop.f32.mrb[0].mxu0
    %v340 = vadd.f32 %v243, %v339
    %v341 = vpop.f32.mrb[0].mxu0
    %v342 = vadd.f32 %v247, %v341
    %343 = vmatprep.mubr.f32.mxu0 0.0
    %344 = vmatmul.mubr.f32.gmra.mrb[0].mxu0 %v164
    %v345 = vpop.f32.mrb[0].mxu0
    %v346 = vadd.f32 %v243, %v345
    %v347 = vpop.f32.mrb[0].mxu0
    %v348 = vadd.f32 %v247, %v347
    %349 = vmatprep.mubr.f32.mxu0 0.0
    %350 = vmatmul.mubr.f32.gmra.mrb[0].mxu0 %v165
    %v351 = vpop.f32.mrb[0].mxu0
    %v352 = vadd.f32 %v243, %v351
    %v353 = vpop.f32.mrb[0].mxu0
    %v354 = vadd.f32 %v247, %v353
    %355 = vmatprep.mubr.f32.mxu0 0.0
    %356 = vmatmul.mubr.f32.gmra.mrb[0].mxu0 %v166
    %v357 = vpop.f32.mrb[0].mxu0
    %v358 = vadd.f32 %v243, %v357
    %v359 = vpop.f32.mrb[0].mxu0
    %v360 = vadd.f32 %v247, %v359
    %361 = vmatprep.mubr.f32.mxu0 0.0
    %362 = vmatmul.mubr.f32.gmra.mrb[0].mxu0 %v167
    %v363 = vpop.f32.mrb[0].mxu0
    %v364 = vadd.f32 %v243, %v363
    %v365 = vpop.f32.mrb[0].mxu0
    %v366 = vadd.f32 %v247, %v365
    %367 = vdwg.mxu0
    %368 = vmatprep.subr.mxu0 0.0
    %369 = vmatpush1.msra.mxu0 %v27
    %370 = vmatprep.subr.mxu0 0.0
    %371 = vmatpush1.msra.mxu0 %v30
    %372 = vmatprep.subr.mxu0 0.0
    %373 = vmatpush1.msra.mxu0 %v33
    %374 = vmatprep.subr.mxu0 0.0
    %375 = vmatpush1.msra.mxu0 %v36
    %376 = vmatprep.subr.mxu0 0.0
    %377 = vmatpush1.msra.mxu0 %v39
    %378 = vmatprep.subr.mxu0 0.0
    %379 = vmatpush1.msra.mxu0 %v42
    %380 = vmatprep.subr.mxu0 0.0
    %381 = vmatpush1.msra.mxu0 %v45
    %382 = vmatprep.subr.mxu0 0.0
    %383 = vmatpush1.msra.mxu0 %v48
    %384 = vmatprep.subr.mxu0 0.0
    %385 = vmatpush1.msra.mxu0 %v51
    %386 = vmatprep.subr.mxu0 0.0
    %387 = vmatpush1.msra.mxu0 %v54
    %388 = vmatprep.subr.mxu0 0.0
    %389 = vmatpush1.msra.mxu0 %v57
    %390 = vmatprep.subr.mxu0 0.0
    %391 = vmatpush1.msra.mxu0 %v60
    %392 = vmatprep.subr.mxu0 0.0
    %393 = vmatpush1.msra.mxu0 %v63
    %394 = vmatprep.subr.mxu0 0.0
    %395 = vmatpush1.msra.mxu0 %v66
    %396 = vmatprep.subr.mxu0 0.0
    %397 = vmatpush1.msra.mxu0 %v69
    %398 = vmatprep.subr.mxu0 0.0
    %399 = vmatpush1.msra.mxu0 %v72
    %400 = vmatprep.subr.mxu0 0.0
    %401 = vmatpush1.msra.mxu0 0.0
    %402 = vmatprep.subr.mxu0 0.0
    %403 = vmatpush1.msra.mxu0 0.0
    %404 = vmatprep.subr.mxu0 0.0
    %405 = vmatpush1.msra.mxu0 0.0
    %406 = vmatprep.subr.mxu0 0.0
    %407 = vmatpush1.msra.mxu0 0.0
    %408 = vmatprep.subr.mxu0 0.0
    %409 = vmatpush1.msra.mxu0 0.0
    %410 = vmatprep.subr.mxu0 0.0
    %411 = vmatpush1.msra.mxu0 0.0
    %412 = vmatprep.subr.mxu0 0.0
    %413 = vmatpush1.msra.mxu0 0.0
    %414 = vmatprep.subr.mxu0 0.0
    %415 = vmatpush1.msra.mxu0 0.0
    %416 = vmatprep.subr.mxu0 0.0
    %417 = vmatpush1.msra.mxu0 0.0
    %418 = vmatprep.subr.mxu0 0.0
    %419 = vmatpush1.msra.mxu0 0.0
    %420 = vmatprep.subr.mxu0 0.0
    %421 = vmatpush1.msra.mxu0 0.0
    %422 = vmatprep.subr.mxu0 0.0
    %423 = vmatpush1.msra.mxu0 0.0
    %424 = vmatprep.subr.mxu0 0.0
    %425 = vmatpush1.msra.mxu0 0.0
    %426 = vmatprep.subr.mxu0 0.0
    %427 = vmatpush1.msra.mxu0 0.0
    %428 = vmatprep.subr.mxu0 0.0
    %429 = vmatpush1.msra.mxu0 0.0
    %430 = vmatprep.subr.mxu0 0.0
    %431 = vmatpush1.msra.mxu0 0.0
    %432 = vmatprep.mubr.f32.mxu0 0.0
    %433 = vmatmul.mubr.f32.gmra.mrb[0].mxu0 %v160
    %v434 = vpop.f32.mrb[0].mxu0
    %v435 = vadd.f32 %v251, %v434
    %v436 = vpop.f32.mrb[0].mxu0
    %437 = vmatprep.mubr.f32.mxu0 0.0
    %438 = vmatmul.mubr.f32.gmra.mrb[0].mxu0 %v161
    %v439 = vpop.f32.mrb[0].mxu0
    %v440 = vadd.f32 %v251, %v439
    %v441 = vpop.f32.mrb[0].mxu0
    %442 = vmatprep.mubr.f32.mxu0 0.0
    %443 = vmatmul.mubr.f32.gmra.mrb[0].mxu0 %v162
    %v444 = vpop.f32.mrb[0].mxu0
    %v445 = vadd.f32 %v251, %v444
    %v446 = vpop.f32.mrb[0].mxu0
    %447 = vmatprep.mubr.f32.mxu0 0.0
    %448 = vmatmul.mubr.f32.gmra.mrb[0].mxu0 %v163
    %v449 = vpop.f32.mrb[0].mxu0
    %v450 = vadd.f32 %v251, %v449
    %v451 = vpop.f32.mrb[0].mxu0
    %452 = vmatprep.mubr.f32.mxu0 0.0
    %453 = vmatmul.mubr.f32.gmra.mrb[0].mxu0 %v164
    %v454 = vpop.f32.mrb[0].mxu0
    %v455 = vadd.f32 %v251, %v454
    %v456 = vpop.f32.mrb[0].mxu0
    %457 = vmatprep.mubr.f32.mxu0 0.0
    %458 = vmatmul.mubr.f32.gmra.mrb[0].mxu0 %v165
    %v459 = vpop.f32.mrb[0].mxu0
    %v460 = vadd.f32 %v251, %v459
    %v461 = vpop.f32.mrb[0].mxu0
    %462 = vmatprep.mubr.f32.mxu0 0.0
    %463 = vmatmul.mubr.f32.gmra.mrb[0].mxu0 %v166
    %v464 = vpop.f32.mrb[0].mxu0
    %v465 = vadd.f32 %v251, %v464
    %v466 = vpop.f32.mrb[0].mxu0
    %467 = vmatprep.mubr.f32.mxu0 0.0
    %468 = vmatmul.mubr.f32.gmra.mrb[0].mxu0 %v167
    %v469 = vpop.f32.mrb[0].mxu0
    %v470 = vadd.f32 %v251, %v469
    %v471 = vpop.f32.mrb[0].mxu0
    %472 = vdwg.mxu0
    %473 = vmatprep.subr.mxu0 %v74
    %474 = vmatpush1.msra.mxu0 %v73
    %475 = vmatprep.subr.mxu0 %v77
    %476 = vmatpush1.msra.mxu0 %v76
    %477 = vmatprep.subr.mxu0 %v80
    %478 = vmatpush1.msra.mxu0 %v79
    %479 = vmatprep.subr.mxu0 %v83
    %480 = vmatpush1.msra.mxu0 %v82
    %481 = vmatprep.subr.mxu0 %v86
    %482 = vmatpush1.msra.mxu0 %v85
    %483 = vmatprep.subr.mxu0 %v89
    %484 = vmatpush1.msra.mxu0 %v88
    %485 = vmatprep.subr.mxu0 %v92
    %486 = vmatpush1.msra.mxu0 %v91
    %487 = vmatprep.subr.mxu0 %v95
    %488 = vmatpush1.msra.mxu0 %v94
    %489 = vmatprep.subr.mxu0 %v98
    %490 = vmatpush1.msra.mxu0 %v97
    %491 = vmatprep.subr.mxu0 %v101
    %492 = vmatpush1.msra.mxu0 %v100
    %493 = vmatprep.subr.mxu0 %v104
    %494 = vmatpush1.msra.mxu0 %v103
    %495 = vmatprep.subr.mxu0 %v107
    %496 = vmatpush1.msra.mxu0 %v106
    %497 = vmatprep.subr.mxu0 %v110
    %498 = vmatpush1.msra.mxu0 %v109
    %499 = vmatprep.subr.mxu0 %v113
    %500 = vmatpush1.msra.mxu0 %v112
    %501 = vmatprep.subr.mxu0 %v116
    %502 = vmatpush1.msra.mxu0 %v115
    %503 = vmatprep.subr.mxu0 %v119
    %504 = vmatpush1.msra.mxu0 %v118
    %505 = vmatprep.subr.mxu0 0.0
    %506 = vmatpush1.msra.mxu0 0.0
    %507 = vmatprep.subr.mxu0 0.0
    %508 = vmatpush1.msra.mxu0 0.0
    %509 = vmatprep.subr.mxu0 0.0
    %510 = vmatpush1.msra.mxu0 0.0
    %511 = vmatprep.subr.mxu0 0.0
    %512 = vmatpush1.msra.mxu0 0.0
    %513 = vmatprep.subr.mxu0 0.0
    %514 = vmatpush1.msra.mxu0 0.0
    %515 = vmatprep.subr.mxu0 0.0
    %516 = vmatpush1.msra.mxu0 0.0
    %517 = vmatprep.subr.mxu0 0.0
    %518 = vmatpush1.msra.mxu0 0.0
    %519 = vmatprep.subr.mxu0 0.0
    %520 = vmatpush1.msra.mxu0 0.0
    %521 = vmatprep.subr.mxu0 0.0
    %522 = vmatpush1.msra.mxu0 0.0
    %523 = vmatprep.subr.mxu0 0.0
    %524 = vmatpush1.msra.mxu0 0.0
    %525 = vmatprep.subr.mxu0 0.0
    %526 = vmatpush1.msra.mxu0 0.0
    %527 = vmatprep.subr.mxu0 0.0
    %528 = vmatpush1.msra.mxu0 0.0
    %529 = vmatprep.subr.mxu0 0.0
    %530 = vmatpush1.msra.mxu0 0.0
    %531 = vmatprep.subr.mxu0 0.0
    %532 = vmatpush1.msra.mxu0 0.0
    %533 = vmatprep.subr.mxu0 0.0
    %534 = vmatpush1.msra.mxu0 0.0
    %535 = vmatprep.subr.mxu0 0.0
    %536 = vmatpush1.msra.mxu0 0.0
    %537 = vmatprep.mubr.f32.mxu0 0.0
    %538 = vmatmul.mubr.f32.gmra.mrb[0].mxu0 %v236
    %v539 = vpop.f32.mrb[0].mxu0
    %v540 = vadd.f32 %v155, %v539
    %v541 = vpop.f32.mrb[0].mxu0
    %v542 = vadd.f32 %v156, %v541
    %543 = vdwg.mxu0
    %544 = vmatprep.subr.mxu0 0.0
    %545 = vmatpush1.msra.mxu0 %v75
    %546 = vmatprep.subr.mxu0 0.0
    %547 = vmatpush1.msra.mxu0 %v78
    %548 = vmatprep.subr.mxu0 0.0
    %549 = vmatpush1.msra.mxu0 %v81
    %550 = vmatprep.subr.mxu0 0.0
    %551 = vmatpush1.msra.mxu0 %v84
    %552 = vmatprep.subr.mxu0 0.0
    %553 = vmatpush1.msra.mxu0 %v87
    %554 = vmatprep.subr.mxu0 0.0
    %555 = vmatpush1.msra.mxu0 %v90
    %556 = vmatprep.subr.mxu0 0.0
    %557 = vmatpush1.msra.mxu0 %v93
    %558 = vmatprep.subr.mxu0 0.0
    %559 = vmatpush1.msra.mxu0 %v96
    %560 = vmatprep.subr.mxu0 0.0
    %561 = vmatpush1.msra.mxu0 %v99
    %562 = vmatprep.subr.mxu0 0.0
    %563 = vmatpush1.msra.mxu0 %v102
    %564 = vmatprep.subr.mxu0 0.0
    %565 = vmatpush1.msra.mxu0 %v105
    %566 = vmatprep.subr.mxu0 0.0
    %567 = vmatpush1.msra.mxu0 %v108
    %568 = vmatprep.subr.mxu0 0.0
    %569 = vmatpush1.msra.mxu0 %v111
    %570 = vmatprep.subr.mxu0 0.0
    %571 = vmatpush1.msra.mxu0 %v114
    %572 = vmatprep.subr.mxu0 0.0
    %573 = vmatpush1.msra.mxu0 %v117
    %574 = vmatprep.subr.mxu0 0.0
    %575 = vmatpush1.msra.mxu0 %v120
    %576 = vmatprep.subr.mxu0 0.0
    %577 = vmatpush1.msra.mxu0 0.0
    %578 = vmatprep.subr.mxu0 0.0
    %579 = vmatpush1.msra.mxu0 0.0
    %580 = vmatprep.subr.mxu0 0.0
    %581 = vmatpush1.msra.mxu0 0.0
    %582 = vmatprep.subr.mxu0 0.0
    %583 = vmatpush1.msra.mxu0 0.0
    %584 = vmatprep.subr.mxu0 0.0
    %585 = vmatpush1.msra.mxu0 0.0
    %586 = vmatprep.subr.mxu0 0.0
    %587 = vmatpush1.msra.mxu0 0.0
    %588 = vmatprep.subr.mxu0 0.0
    %589 = vmatpush1.msra.mxu0 0.0
    %590 = vmatprep.subr.mxu0 0.0
    %591 = vmatpush1.msra.mxu0 0.0
    %592 = vmatprep.subr.mxu0 0.0
    %593 = vmatpush1.msra.mxu0 0.0
    %594 = vmatprep.subr.mxu0 0.0
    %595 = vmatpush1.msra.mxu0 0.0
    %596 = vmatprep.subr.mxu0 0.0
    %597 = vmatpush1.msra.mxu0 0.0
    %598 = vmatprep.subr.mxu0 0.0
    %599 = vmatpush1.msra.mxu0 0.0
    %600 = vmatprep.subr.mxu0 0.0
    %601 = vmatpush1.msra.mxu0 0.0
    %602 = vmatprep.subr.mxu0 0.0
    %603 = vmatpush1.msra.mxu0 0.0
    %604 = vmatprep.subr.mxu0 0.0
    %605 = vmatpush1.msra.mxu0 0.0
    %606 = vmatprep.subr.mxu0 0.0
    %607 = vmatpush1.msra.mxu0 0.0
    %608 = vmatprep.mubr.f32.mxu0 0.0
    %609 = vmatmul.mubr.f32.gmra.mrb[0].mxu0 %v236
    %v610 = vpop.f32.mrb[0].mxu0
    %v611 = vadd.f32 %v157, %v610
    %v612 = vpop.f32.mrb[0].mxu0
    %613 = vdwg.mxu0
    %v614 = vadd.f32 %v322, %v540
    %v615 = vadd.f32 %v324, %v542
    %v616 = vxor.u32 %v614, 2147483648
    %v617 = vxor.u32 %v615, 2147483648
    %v618 = vmul.f32 %v616, 1.442695
    %v619 = vpow.pop %v618
    %v620 = vmul.f32 %v617, 1.442695
    %v621 = vpow.pop %v620
    %v622 = vadd.f32 %v619, 1.0
    %v623 = vadd.f32 %v621, 1.0
    %v624 = vrcp.pop %v622
    %v625 = vmul.f32 1.0, %v624
    %v626 = vrcp.pop %v623
    %v627 = vmul.f32 1.0, %v626
    %v628 = vmul.f32 %v625, %v611
    %v629 = vadd.f32 %v435, %v628
    %v630 = vtanh.pop %v629
    %v631 = vsub.f32 %v236, %v630
    %v632 = vmul.f32 %v627, %v631
    %v633 = vadd.f32 %v630, %v632
    %634 = vst [vmem:[#allocation2] sm:$0xff] %v633
    %635 = vmatprep.subr.mxu0 %v74
    %636 = vmatpush1.msra.mxu0 %v73
    %637 = vmatprep.subr.mxu0 %v77
    %638 = vmatpush1.msra.mxu0 %v76
    %639 = vmatprep.subr.mxu0 %v80
    %640 = vmatpush1.msra.mxu0 %v79
    %641 = vmatprep.subr.mxu0 %v83
    %642 = vmatpush1.msra.mxu0 %v82
    %643 = vmatprep.subr.mxu0 %v86
    %644 = vmatpush1.msra.mxu0 %v85
    %645 = vmatprep.subr.mxu0 %v89
    %646 = vmatpush1.msra.mxu0 %v88
    %647 = vmatprep.subr.mxu0 %v92
    %648 = vmatpush1.msra.mxu0 %v91
    %649 = vmatprep.subr.mxu0 %v95
    %650 = vmatpush1.msra.mxu0 %v94
    %651 = vmatprep.subr.mxu0 %v98
    %652 = vmatpush1.msra.mxu0 %v97
    %653 = vmatprep.subr.mxu0 %v101
    %654 = vmatpush1.msra.mxu0 %v100
    %655 = vmatprep.subr.mxu0 %v104
    %656 = vmatpush1.msra.mxu0 %v103
    %657 = vmatprep.subr.mxu0 %v107
    %658 = vmatpush1.msra.mxu0 %v106
    %659 = vmatprep.subr.mxu0 %v110
    %660 = vmatpush1.msra.mxu0 %v109
    %661 = vmatprep.subr.mxu0 %v113
    %662 = vmatpush1.msra.mxu0 %v112
    %663 = vmatprep.subr.mxu0 %v116
    %664 = vmatpush1.msra.mxu0 %v115
    %665 = vmatprep.subr.mxu0 %v119
    %666 = vmatpush1.msra.mxu0 %v118
    %667 = vmatprep.subr.mxu0 0.0
    %668 = vmatpush1.msra.mxu0 0.0
    %669 = vmatprep.subr.mxu0 0.0
    %670 = vmatpush1.msra.mxu0 0.0
    %671 = vmatprep.subr.mxu0 0.0
    %672 = vmatpush1.msra.mxu0 0.0
    %673 = vmatprep.subr.mxu0 0.0
    %674 = vmatpush1.msra.mxu0 0.0
    %675 = vmatprep.subr.mxu0 0.0
    %676 = vmatpush1.msra.mxu0 0.0
    %677 = vmatprep.subr.mxu0 0.0
    %678 = vmatpush1.msra.mxu0 0.0
    %679 = vmatprep.subr.mxu0 0.0
    %680 = vmatpush1.msra.mxu0 0.0
    %681 = vmatprep.subr.mxu0 0.0
    %682 = vmatpush1.msra.mxu0 0.0
    %683 = vmatprep.subr.mxu0 0.0
    %684 = vmatpush1.msra.mxu0 0.0
    %685 = vmatprep.subr.mxu0 0.0
    %686 = vmatpush1.msra.mxu0 0.0
    %687 = vmatprep.subr.mxu0 0.0
    %688 = vmatpush1.msra.mxu0 0.0
    %689 = vmatprep.subr.mxu0 0.0
    %690 = vmatpush1.msra.mxu0 0.0
    %691 = vmatprep.subr.mxu0 0.0
    %692 = vmatpush1.msra.mxu0 0.0
    %693 = vmatprep.subr.mxu0 0.0
    %694 = vmatpush1.msra.mxu0 0.0
    %695 = vmatprep.subr.mxu0 0.0
    %696 = vmatpush1.msra.mxu0 0.0
    %697 = vmatprep.subr.mxu0 0.0
    %698 = vmatpush1.msra.mxu0 0.0
    %699 = vmatprep.mubr.f32.mxu0 0.0
    %700 = vmatmul.mubr.f32.gmra.mrb[0].mxu0 %v633
    %v701 = vpop.f32.mrb[0].mxu0
    %v702 = vadd.f32 %v155, %v701
    %v703 = vpop.f32.mrb[0].mxu0
    %v704 = vadd.f32 %v156, %v703
    %705 = vdwg.mxu0
    %706 = vmatprep.subr.mxu0 0.0
    %707 = vmatpush1.msra.mxu0 %v75
    %708 = vmatprep.subr.mxu0 0.0
    %709 = vmatpush1.msra.mxu0 %v78
    %710 = vmatprep.subr.mxu0 0.0
    %711 = vmatpush1.msra.mxu0 %v81
    %712 = vmatprep.subr.mxu0 0.0
    %713 = vmatpush1.msra.mxu0 %v84
    %714 = vmatprep.subr.mxu0 0.0
    %715 = vmatpush1.msra.mxu0 %v87
    %716 = vmatprep.subr.mxu0 0.0
    %717 = vmatpush1.msra.mxu0 %v90
    %718 = vmatprep.subr.mxu0 0.0
    %719 = vmatpush1.msra.mxu0 %v93
    %720 = vmatprep.subr.mxu0 0.0
    %721 = vmatpush1.msra.mxu0 %v96
    %722 = vmatprep.subr.mxu0 0.0
    %723 = vmatpush1.msra.mxu0 %v99
    %724 = vmatprep.subr.mxu0 0.0
    %725 = vmatpush1.msra.mxu0 %v102
    %726 = vmatprep.subr.mxu0 0.0
    %727 = vmatpush1.msra.mxu0 %v105
    %728 = vmatprep.subr.mxu0 0.0
    %729 = vmatpush1.msra.mxu0 %v108
    %730 = vmatprep.subr.mxu0 0.0
    %731 = vmatpush1.msra.mxu0 %v111
    %732 = vmatprep.subr.mxu0 0.0
    %733 = vmatpush1.msra.mxu0 %v114
    %734 = vmatprep.subr.mxu0 0.0
    %735 = vmatpush1.msra.mxu0 %v117
    %736 = vmatprep.subr.mxu0 0.0
    %737 = vmatpush1.msra.mxu0 %v120
    %738 = vmatprep.subr.mxu0 0.0
    %739 = vmatpush1.msra.mxu0 0.0
    %740 = vmatprep.subr.mxu0 0.0
    %741 = vmatpush1.msra.mxu0 0.0
    %742 = vmatprep.subr.mxu0 0.0
    %743 = vmatpush1.msra.mxu0 0.0
    %744 = vmatprep.subr.mxu0 0.0
    %745 = vmatpush1.msra.mxu0 0.0
    %746 = vmatprep.subr.mxu0 0.0
    %747 = vmatpush1.msra.mxu0 0.0
    %748 = vmatprep.subr.mxu0 0.0
    %749 = vmatpush1.msra.mxu0 0.0
    %750 = vmatprep.subr.mxu0 0.0
    %751 = vmatpush1.msra.mxu0 0.0
    %752 = vmatprep.subr.mxu0 0.0
    %753 = vmatpush1.msra.mxu0 0.0
    %754 = vmatprep.subr.mxu0 0.0
    %755 = vmatpush1.msra.mxu0 0.0
    %756 = vmatprep.subr.mxu0 0.0
    %757 = vmatpush1.msra.mxu0 0.0
    %758 = vmatprep.subr.mxu0 0.0
    %759 = vmatpush1.msra.mxu0 0.0
    %760 = vmatprep.subr.mxu0 0.0
    %761 = vmatpush1.msra.mxu0 0.0
    %762 = vmatprep.subr.mxu0 0.0
    %763 = vmatpush1.msra.mxu0 0.0
    %764 = vmatprep.subr.mxu0 0.0
    %765 = vmatpush1.msra.mxu0 0.0
    %766 = vmatprep.subr.mxu0 0.0
    %767 = vmatpush1.msra.mxu0 0.0
    %768 = vmatprep.subr.mxu0 0.0
    %769 = vmatpush1.msra.mxu0 0.0
    %770 = vmatprep.mubr.f32.mxu0 0.0
    %771 = vmatmul.mubr.f32.gmra.mrb[0].mxu0 %v633
    %v772 = vpop.f32.mrb[0].mxu0
    %v773 = vadd.f32 %v157, %v772
    %v774 = vpop.f32.mrb[0].mxu0
    %775 = vdwg.mxu0
    %v776 = vadd.f32 %v328, %v702
    %v777 = vadd.f32 %v330, %v704
    %v778 = vxor.u32 %v776, 2147483648
    %v779 = vxor.u32 %v777, 2147483648
    %v780 = vmul.f32 %v778, 1.442695
    %v781 = vpow.pop %v780
    %v782 = vmul.f32 %v779, 1.442695
    %v783 = vpow.pop %v782
    %v784 = vadd.f32 %v781, 1.0
    %v785 = vadd.f32 %v783, 1.0
    %v786 = vrcp.pop %v784
    %v787 = vmul.f32 1.0, %v786
    %v788 = vrcp.pop %v785
    %v789 = vmul.f32 1.0, %v788
    %v790 = vmul.f32 %v787, %v773
    %v791 = vadd.f32 %v440, %v790
    %v792 = vtanh.pop %v791
    %v793 = vsub.f32 %v633, %v792
    %v794 = vmul.f32 %v789, %v793
    %v795 = vadd.f32 %v792, %v794
    %796 = vst [vmem:[#allocation2 + $0x8] sm:$0xff] %v795
    %797 = vmatprep.subr.mxu0 %v74
    %798 = vmatpush1.msra.mxu0 %v73
    %799 = vmatprep.subr.mxu0 %v77
    %800 = vmatpush1.msra.mxu0 %v76
    %801 = vmatprep.subr.mxu0 %v80
    %802 = vmatpush1.msra.mxu0 %v79
    %803 = vmatprep.subr.mxu0 %v83
    %804 = vmatpush1.msra.mxu0 %v82
    %805 = vmatprep.subr.mxu0 %v86
    %806 = vmatpush1.msra.mxu0 %v85
    %807 = vmatprep.subr.mxu0 %v89
    %808 = vmatpush1.msra.mxu0 %v88
    %809 = vmatprep.subr.mxu0 %v92
    %810 = vmatpush1.msra.mxu0 %v91
    %811 = vmatprep.subr.mxu0 %v95
    %812 = vmatpush1.msra.mxu0 %v94
    %813 = vmatprep.subr.mxu0 %v98
    %814 = vmatpush1.msra.mxu0 %v97
    %815 = vmatprep.subr.mxu0 %v101
    %816 = vmatpush1.msra.mxu0 %v100
    %817 = vmatprep.subr.mxu0 %v104
    %818 = vmatpush1.msra.mxu0 %v103
    %819 = vmatprep.subr.mxu0 %v107
    %820 = vmatpush1.msra.mxu0 %v106
    %821 = vmatprep.subr.mxu0 %v110
    %822 = vmatpush1.msra.mxu0 %v109
    %823 = vmatprep.subr.mxu0 %v113
    %824 = vmatpush1.msra.mxu0 %v112
    %825 = vmatprep.subr.mxu0 %v116
    %826 = vmatpush1.msra.mxu0 %v115
    %827 = vmatprep.subr.mxu0 %v119
    %828 = vmatpush1.msra.mxu0 %v118
    %829 = vmatprep.subr.mxu0 0.0
    %830 = vmatpush1.msra.mxu0 0.0
    %831 = vmatprep.subr.mxu0 0.0
    %832 = vmatpush1.msra.mxu0 0.0
    %833 = vmatprep.subr.mxu0 0.0
    %834 = vmatpush1.msra.mxu0 0.0
    %835 = vmatprep.subr.mxu0 0.0
    %836 = vmatpush1.msra.mxu0 0.0
    %837 = vmatprep.subr.mxu0 0.0
    %838 = vmatpush1.msra.mxu0 0.0
    %839 = vmatprep.subr.mxu0 0.0
    %840 = vmatpush1.msra.mxu0 0.0
    %841 = vmatprep.subr.mxu0 0.0
    %842 = vmatpush1.msra.mxu0 0.0
    %843 = vmatprep.subr.mxu0 0.0
    %844 = vmatpush1.msra.mxu0 0.0
    %845 = vmatprep.subr.mxu0 0.0
    %846 = vmatpush1.msra.mxu0 0.0
    %847 = vmatprep.subr.mxu0 0.0
    %848 = vmatpush1.msra.mxu0 0.0
    %849 = vmatprep.subr.mxu0 0.0
    %850 = vmatpush1.msra.mxu0 0.0
    %851 = vmatprep.subr.mxu0 0.0
    %852 = vmatpush1.msra.mxu0 0.0
    %853 = vmatprep.subr.mxu0 0.0
    %854 = vmatpush1.msra.mxu0 0.0
    %855 = vmatprep.subr.mxu0 0.0
    %856 = vmatpush1.msra.mxu0 0.0
    %857 = vmatprep.subr.mxu0 0.0
    %858 = vmatpush1.msra.mxu0 0.0
    %859 = vmatprep.subr.mxu0 0.0
    %860 = vmatpush1.msra.mxu0 0.0
    %861 = vmatprep.mubr.f32.mxu0 0.0
    %862 = vmatmul.mubr.f32.gmra.mrb[0].mxu0 %v795
    %v863 = vpop.f32.mrb[0].mxu0
    %v864 = vadd.f32 %v155, %v863
    %v865 = vpop.f32.mrb[0].mxu0
    %v866 = vadd.f32 %v156, %v865
    %867 = vdwg.mxu0
    %868 = vmatprep.subr.mxu0 0.0
    %869 = vmatpush1.msra.mxu0 %v75
    %870 = vmatprep.subr.mxu0 0.0
    %871 = vmatpush1.msra.mxu0 %v78
    %872 = vmatprep.subr.mxu0 0.0
    %873 = vmatpush1.msra.mxu0 %v81
    %874 = vmatprep.subr.mxu0 0.0
    %875 = vmatpush1.msra.mxu0 %v84
    %876 = vmatprep.subr.mxu0 0.0
    %877 = vmatpush1.msra.mxu0 %v87
    %878 = vmatprep.subr.mxu0 0.0
    %879 = vmatpush1.msra.mxu0 %v90
    %880 = vmatprep.subr.mxu0 0.0
    %881 = vmatpush1.msra.mxu0 %v93
    %882 = vmatprep.subr.mxu0 0.0
    %883 = vmatpush1.msra.mxu0 %v96
    %884 = vmatprep.subr.mxu0 0.0
    %885 = vmatpush1.msra.mxu0 %v99
    %886 = vmatprep.subr.mxu0 0.0
    %887 = vmatpush1.msra.mxu0 %v102
    %888 = vmatprep.subr.mxu0 0.0
    %889 = vmatpush1.msra.mxu0 %v105
    %890 = vmatprep.subr.mxu0 0.0
    %891 = vmatpush1.msra.mxu0 %v108
    %892 = vmatprep.subr.mxu0 0.0
    %893 = vmatpush1.msra.mxu0 %v111
    %894 = vmatprep.subr.mxu0 0.0
    %895 = vmatpush1.msra.mxu0 %v114
    %896 = vmatprep.subr.mxu0 0.0
    %897 = vmatpush1.msra.mxu0 %v117
    %898 = vmatprep.subr.mxu0 0.0
    %899 = vmatpush1.msra.mxu0 %v120
    %900 = vmatprep.subr.mxu0 0.0
    %901 = vmatpush1.msra.mxu0 0.0
    %902 = vmatprep.subr.mxu0 0.0
    %903 = vmatpush1.msra.mxu0 0.0
    %904 = vmatprep.subr.mxu0 0.0
    %905 = vmatpush1.msra.mxu0 0.0
    %906 = vmatprep.subr.mxu0 0.0
    %907 = vmatpush1.msra.mxu0 0.0
    %908 = vmatprep.subr.mxu0 0.0
    %909 = vmatpush1.msra.mxu0 0.0
    %910 = vmatprep.subr.mxu0 0.0
    %911 = vmatpush1.msra.mxu0 0.0
    %912 = vmatprep.subr.mxu0 0.0
    %913 = vmatpush1.msra.mxu0 0.0
    %914 = vmatprep.subr.mxu0 0.0
    %915 = vmatpush1.msra.mxu0 0.0
    %916 = vmatprep.subr.mxu0 0.0
    %917 = vmatpush1.msra.mxu0 0.0
    %918 = vmatprep.subr.mxu0 0.0
    %919 = vmatpush1.msra.mxu0 0.0
    %920 = vmatprep.subr.mxu0 0.0
    %921 = vmatpush1.msra.mxu0 0.0
    %922 = vmatprep.subr.mxu0 0.0
    %923 = vmatpush1.msra.mxu0 0.0
    %924 = vmatprep.subr.mxu0 0.0
    %925 = vmatpush1.msra.mxu0 0.0
    %926 = vmatprep.subr.mxu0 0.0
    %927 = vmatpush1.msra.mxu0 0.0
    %928 = vmatprep.subr.mxu0 0.0
    %929 = vmatpush1.msra.mxu0 0.0
    %930 = vmatprep.subr.mxu0 0.0
    %931 = vmatpush1.msra.mxu0 0.0
    %932 = vmatprep.mubr.f32.mxu0 0.0
    %933 = vmatmul.mubr.f32.gmra.mrb[0].mxu0 %v795
    %v934 = vpop.f32.mrb[0].mxu0
    %v935 = vadd.f32 %v157, %v934
    %v936 = vpop.f32.mrb[0].mxu0
    %937 = vdwg.mxu0
    %v938 = vadd.f32 %v334, %v864
    %v939 = vadd.f32 %v336, %v866
    %v940 = vxor.u32 %v938, 2147483648
    %v941 = vxor.u32 %v939, 2147483648
    %v942 = vmul.f32 %v940, 1.442695
    %v943 = vpow.pop %v942
    %v944 = vmul.f32 %v941, 1.442695
    %v945 = vpow.pop %v944
    %v946 = vadd.f32 %v943, 1.0
    %v947 = vadd.f32 %v945, 1.0
    %v948 = vrcp.pop %v946
    %v949 = vmul.f32 1.0, %v948
    %v950 = vrcp.pop %v947
    %v951 = vmul.f32 1.0, %v950
    %v952 = vmul.f32 %v949, %v935
    %v953 = vadd.f32 %v445, %v952
    %v954 = vtanh.pop %v953
    %v955 = vsub.f32 %v795, %v954
    %v956 = vmul.f32 %v951, %v955
    %v957 = vadd.f32 %v954, %v956
    %958 = vst [vmem:[#allocation2 + $0x10] sm:$0xff] %v957
    %959 = vmatprep.subr.mxu0 %v74
    %960 = vmatpush1.msra.mxu0 %v73
    %961 = vmatprep.subr.mxu0 %v77
    %962 = vmatpush1.msra.mxu0 %v76
    %963 = vmatprep.subr.mxu0 %v80
    %964 = vmatpush1.msra.mxu0 %v79
    %965 = vmatprep.subr.mxu0 %v83
    %966 = vmatpush1.msra.mxu0 %v82
    %967 = vmatprep.subr.mxu0 %v86
    %968 = vmatpush1.msra.mxu0 %v85
    %969 = vmatprep.subr.mxu0 %v89
    %970 = vmatpush1.msra.mxu0 %v88
    %971 = vmatprep.subr.mxu0 %v92
    %972 = vmatpush1.msra.mxu0 %v91
    %973 = vmatprep.subr.mxu0 %v95
    %974 = vmatpush1.msra.mxu0 %v94
    %975 = vmatprep.subr.mxu0 %v98
    %976 = vmatpush1.msra.mxu0 %v97
    %977 = vmatprep.subr.mxu0 %v101
    %978 = vmatpush1.msra.mxu0 %v100
    %979 = vmatprep.subr.mxu0 %v104
    %980 = vmatpush1.msra.mxu0 %v103
    %981 = vmatprep.subr.mxu0 %v107
    %982 = vmatpush1.msra.mxu0 %v106
    %983 = vmatprep.subr.mxu0 %v110
    %984 = vmatpush1.msra.mxu0 %v109
    %985 = vmatprep.subr.mxu0 %v113
    %986 = vmatpush1.msra.mxu0 %v112
    %987 = vmatprep.subr.mxu0 %v116
    %988 = vmatpush1.msra.mxu0 %v115
    %989 = vmatprep.subr.mxu0 %v119
    %990 = vmatpush1.msra.mxu0 %v118
    %991 = vmatprep.subr.mxu0 0.0
    %992 = vmatpush1.msra.mxu0 0.0
    %993 = vmatprep.subr.mxu0 0.0
    %994 = vmatpush1.msra.mxu0 0.0
    %995 = vmatprep.subr.mxu0 0.0
    %996 = vmatpush1.msra.mxu0 0.0
    %997 = vmatprep.subr.mxu0 0.0
    %998 = vmatpush1.msra.mxu0 0.0
    %999 = vmatprep.subr.mxu0 0.0
    %1000 = vmatpush1.msra.mxu0 0.0
    %1001 = vmatprep.subr.mxu0 0.0
    %1002 = vmatpush1.msra.mxu0 0.0
    %1003 = vmatprep.subr.mxu0 0.0
    %1004 = vmatpush1.msra.mxu0 0.0
    %1005 = vmatprep.subr.mxu0 0.0
    %1006 = vmatpush1.msra.mxu0 0.0
    %1007 = vmatprep.subr.mxu0 0.0
    %1008 = vmatpush1.msra.mxu0 0.0
    %1009 = vmatprep.subr.mxu0 0.0
    %1010 = vmatpush1.msra.mxu0 0.0
    %1011 = vmatprep.subr.mxu0 0.0
    %1012 = vmatpush1.msra.mxu0 0.0
    %1013 = vmatprep.subr.mxu0 0.0
    %1014 = vmatpush1.msra.mxu0 0.0
    %1015 = vmatprep.subr.mxu0 0.0
    %1016 = vmatpush1.msra.mxu0 0.0
    %1017 = vmatprep.subr.mxu0 0.0
    %1018 = vmatpush1.msra.mxu0 0.0
    %1019 = vmatprep.subr.mxu0 0.0
    %1020 = vmatpush1.msra.mxu0 0.0
    %1021 = vmatprep.subr.mxu0 0.0
    %1022 = vmatpush1.msra.mxu0 0.0
    %1023 = vmatprep.mubr.f32.mxu0 0.0
    %1024 = vmatmul.mubr.f32.gmra.mrb[0].mxu0 %v957
    %v1025 = vpop.f32.mrb[0].mxu0
    %v1026 = vadd.f32 %v155, %v1025
    %v1027 = vpop.f32.mrb[0].mxu0
    %v1028 = vadd.f32 %v156, %v1027
    %1029 = vdwg.mxu0
    %1030 = vmatprep.subr.mxu0 0.0
    %1031 = vmatpush1.msra.mxu0 %v75
    %1032 = vmatprep.subr.mxu0 0.0
    %1033 = vmatpush1.msra.mxu0 %v78
    %1034 = vmatprep.subr.mxu0 0.0
    %1035 = vmatpush1.msra.mxu0 %v81
    %1036 = vmatprep.subr.mxu0 0.0
    %1037 = vmatpush1.msra.mxu0 %v84
    %1038 = vmatprep.subr.mxu0 0.0
    %1039 = vmatpush1.msra.mxu0 %v87
    %1040 = vmatprep.subr.mxu0 0.0
    %1041 = vmatpush1.msra.mxu0 %v90
    %1042 = vmatprep.subr.mxu0 0.0
    %1043 = vmatpush1.msra.mxu0 %v93
    %1044 = vmatprep.subr.mxu0 0.0
    %1045 = vmatpush1.msra.mxu0 %v96
    %1046 = vmatprep.subr.mxu0 0.0
    %1047 = vmatpush1.msra.mxu0 %v99
    %1048 = vmatprep.subr.mxu0 0.0
    %1049 = vmatpush1.msra.mxu0 %v102
    %1050 = vmatprep.subr.mxu0 0.0
    %1051 = vmatpush1.msra.mxu0 %v105
    %1052 = vmatprep.subr.mxu0 0.0
    %1053 = vmatpush1.msra.mxu0 %v108
    %1054 = vmatprep.subr.mxu0 0.0
    %1055 = vmatpush1.msra.mxu0 %v111
    %1056 = vmatprep.subr.mxu0 0.0
    %1057 = vmatpush1.msra.mxu0 %v114
    %1058 = vmatprep.subr.mxu0 0.0
    %1059 = vmatpush1.msra.mxu0 %v117
    %1060 = vmatprep.subr.mxu0 0.0
    %1061 = vmatpush1.msra.mxu0 %v120
    %1062 = vmatprep.subr.mxu0 0.0
    %1063 = vmatpush1.msra.mxu0 0.0
    %1064 = vmatprep.subr.mxu0 0.0
    %1065 = vmatpush1.msra.mxu0 0.0
    %1066 = vmatprep.subr.mxu0 0.0
    %1067 = vmatpush1.msra.mxu0 0.0
    %1068 = vmatprep.subr.mxu0 0.0
    %1069 = vmatpush1.msra.mxu0 0.0
    %1070 = vmatprep.subr.mxu0 0.0
    %1071 = vmatpush1.msra.mxu0 0.0
    %1072 = vmatprep.subr.mxu0 0.0
    %1073 = vmatpush1.msra.mxu0 0.0
    %1074 = vmatprep.subr.mxu0 0.0
    %1075 = vmatpush1.msra.mxu0 0.0
    %1076 = vmatprep.subr.mxu0 0.0
    %1077 = vmatpush1.msra.mxu0 0.0
    %1078 = vmatprep.subr.mxu0 0.0
    %1079 = vmatpush1.msra.mxu0 0.0
    %1080 = vmatprep.subr.mxu0 0.0
    %1081 = vmatpush1.msra.mxu0 0.0
    %1082 = vmatprep.subr.mxu0 0.0
    %1083 = vmatpush1.msra.mxu0 0.0
    %1084 = vmatprep.subr.mxu0 0.0
    %1085 = vmatpush1.msra.mxu0 0.0
    %1086 = vmatprep.subr.mxu0 0.0
    %1087 = vmatpush1.msra.mxu0 0.0
    %1088 = vmatprep.subr.mxu0 0.0
    %1089 = vmatpush1.msra.mxu0 0.0
    %1090 = vmatprep.subr.mxu0 0.0
    %1091 = vmatpush1.msra.mxu0 0.0
    %1092 = vmatprep.subr.mxu0 0.0
    %1093 = vmatpush1.msra.mxu0 0.0
    %1094 = vmatprep.mubr.f32.mxu0 0.0
    %1095 = vmatmul.mubr.f32.gmra.mrb[0].mxu0 %v957
    %v1096 = vpop.f32.mrb[0].mxu0
    %v1097 = vadd.f32 %v157, %v1096
    %v1098 = vpop.f32.mrb[0].mxu0
    %1099 = vdwg.mxu0
    %v1100 = vadd.f32 %v340, %v1026
    %v1101 = vadd.f32 %v342, %v1028
    %v1102 = vxor.u32 %v1100, 2147483648
    %v1103 = vxor.u32 %v1101, 2147483648
    %v1104 = vmul.f32 %v1102, 1.442695
    %v1105 = vpow.pop %v1104
    %v1106 = vmul.f32 %v1103, 1.442695
    %v1107 = vpow.pop %v1106
    %v1108 = vadd.f32 %v1105, 1.0
    %v1109 = vadd.f32 %v1107, 1.0
    %v1110 = vrcp.pop %v1108
    %v1111 = vmul.f32 1.0, %v1110
    %v1112 = vrcp.pop %v1109
    %v1113 = vmul.f32 1.0, %v1112
    %v1114 = vmul.f32 %v1111, %v1097
    %v1115 = vadd.f32 %v450, %v1114
    %v1116 = vtanh.pop %v1115
    %v1117 = vsub.f32 %v957, %v1116
    %v1118 = vmul.f32 %v1113, %v1117
    %v1119 = vadd.f32 %v1116, %v1118
    %1120 = vst [vmem:[#allocation2 + $0x18] sm:$0xff] %v1119
    %1121 = vmatprep.subr.mxu0 %v74
    %1122 = vmatpush1.msra.mxu0 %v73
    %1123 = vmatprep.subr.mxu0 %v77
    %1124 = vmatpush1.msra.mxu0 %v76
    %1125 = vmatprep.subr.mxu0 %v80
    %1126 = vmatpush1.msra.mxu0 %v79
    %1127 = vmatprep.subr.mxu0 %v83
    %1128 = vmatpush1.msra.mxu0 %v82
    %1129 = vmatprep.subr.mxu0 %v86
    %1130 = vmatpush1.msra.mxu0 %v85
    %1131 = vmatprep.subr.mxu0 %v89
    %1132 = vmatpush1.msra.mxu0 %v88
    %1133 = vmatprep.subr.mxu0 %v92
    %1134 = vmatpush1.msra.mxu0 %v91
    %1135 = vmatprep.subr.mxu0 %v95
    %1136 = vmatpush1.msra.mxu0 %v94
    %1137 = vmatprep.subr.mxu0 %v98
    %1138 = vmatpush1.msra.mxu0 %v97
    %1139 = vmatprep.subr.mxu0 %v101
    %1140 = vmatpush1.msra.mxu0 %v100
    %1141 = vmatprep.subr.mxu0 %v104
    %1142 = vmatpush1.msra.mxu0 %v103
    %1143 = vmatprep.subr.mxu0 %v107
    %1144 = vmatpush1.msra.mxu0 %v106
    %1145 = vmatprep.subr.mxu0 %v110
    %1146 = vmatpush1.msra.mxu0 %v109
    %1147 = vmatprep.subr.mxu0 %v113
    %1148 = vmatpush1.msra.mxu0 %v112
    %1149 = vmatprep.subr.mxu0 %v116
    %1150 = vmatpush1.msra.mxu0 %v115
    %1151 = vmatprep.subr.mxu0 %v119
    %1152 = vmatpush1.msra.mxu0 %v118
    %1153 = vmatprep.subr.mxu0 0.0
    %1154 = vmatpush1.msra.mxu0 0.0
    %1155 = vmatprep.subr.mxu0 0.0
    %1156 = vmatpush1.msra.mxu0 0.0
    %1157 = vmatprep.subr.mxu0 0.0
    %1158 = vmatpush1.msra.mxu0 0.0
    %1159 = vmatprep.subr.mxu0 0.0
    %1160 = vmatpush1.msra.mxu0 0.0
    %1161 = vmatprep.subr.mxu0 0.0
    %1162 = vmatpush1.msra.mxu0 0.0
    %1163 = vmatprep.subr.mxu0 0.0
    %1164 = vmatpush1.msra.mxu0 0.0
    %1165 = vmatprep.subr.mxu0 0.0
    %1166 = vmatpush1.msra.mxu0 0.0
    %1167 = vmatprep.subr.mxu0 0.0
    %1168 = vmatpush1.msra.mxu0 0.0
    %1169 = vmatprep.subr.mxu0 0.0
    %1170 = vmatpush1.msra.mxu0 0.0
    %1171 = vmatprep.subr.mxu0 0.0
    %1172 = vmatpush1.msra.mxu0 0.0
    %1173 = vmatprep.subr.mxu0 0.0
    %1174 = vmatpush1.msra.mxu0 0.0
    %1175 = vmatprep.subr.mxu0 0.0
    %1176 = vmatpush1.msra.mxu0 0.0
    %1177 = vmatprep.subr.mxu0 0.0
    %1178 = vmatpush1.msra.mxu0 0.0
    %1179 = vmatprep.subr.mxu0 0.0
    %1180 = vmatpush1.msra.mxu0 0.0
    %1181 = vmatprep.subr.mxu0 0.0
    %1182 = vmatpush1.msra.mxu0 0.0
    %1183 = vmatprep.subr.mxu0 0.0
    %1184 = vmatpush1.msra.mxu0 0.0
    %1185 = vmatprep.mubr.f32.mxu0 0.0
    %1186 = vmatmul.mubr.f32.gmra.mrb[0].mxu0 %v1119
    %v1187 = vpop.f32.mrb[0].mxu0
    %v1188 = vadd.f32 %v155, %v1187
    %v1189 = vpop.f32.mrb[0].mxu0
    %v1190 = vadd.f32 %v156, %v1189
    %1191 = vdwg.mxu0
    %1192 = vmatprep.subr.mxu0 0.0
    %1193 = vmatpush1.msra.mxu0 %v75
    %1194 = vmatprep.subr.mxu0 0.0
    %1195 = vmatpush1.msra.mxu0 %v78
    %1196 = vmatprep.subr.mxu0 0.0
    %1197 = vmatpush1.msra.mxu0 %v81
    %1198 = vmatprep.subr.mxu0 0.0
    %1199 = vmatpush1.msra.mxu0 %v84
    %1200 = vmatprep.subr.mxu0 0.0
    %1201 = vmatpush1.msra.mxu0 %v87
    %1202 = vmatprep.subr.mxu0 0.0
    %1203 = vmatpush1.msra.mxu0 %v90
    %1204 = vmatprep.subr.mxu0 0.0
    %1205 = vmatpush1.msra.mxu0 %v93
    %1206 = vmatprep.subr.mxu0 0.0
    %1207 = vmatpush1.msra.mxu0 %v96
    %1208 = vmatprep.subr.mxu0 0.0
    %1209 = vmatpush1.msra.mxu0 %v99
    %1210 = vmatprep.subr.mxu0 0.0
    %1211 = vmatpush1.msra.mxu0 %v102
    %1212 = vmatprep.subr.mxu0 0.0
    %1213 = vmatpush1.msra.mxu0 %v105
    %1214 = vmatprep.subr.mxu0 0.0
    %1215 = vmatpush1.msra.mxu0 %v108
    %1216 = vmatprep.subr.mxu0 0.0
    %1217 = vmatpush1.msra.mxu0 %v111
    %1218 = vmatprep.subr.mxu0 0.0
    %1219 = vmatpush1.msra.mxu0 %v114
    %1220 = vmatprep.subr.mxu0 0.0
    %1221 = vmatpush1.msra.mxu0 %v117
    %1222 = vmatprep.subr.mxu0 0.0
    %1223 = vmatpush1.msra.mxu0 %v120
    %1224 = vmatprep.subr.mxu0 0.0
    %1225 = vmatpush1.msra.mxu0 0.0
    %1226 = vmatprep.subr.mxu0 0.0
    %1227 = vmatpush1.msra.mxu0 0.0
    %1228 = vmatprep.subr.mxu0 0.0
    %1229 = vmatpush1.msra.mxu0 0.0
    %1230 = vmatprep.subr.mxu0 0.0
    %1231 = vmatpush1.msra.mxu0 0.0
    %1232 = vmatprep.subr.mxu0 0.0
    %1233 = vmatpush1.msra.mxu0 0.0
    %1234 = vmatprep.subr.mxu0 0.0
    %1235 = vmatpush1.msra.mxu0 0.0
    %1236 = vmatprep.subr.mxu0 0.0
    %1237 = vmatpush1.msra.mxu0 0.0
    %1238 = vmatprep.subr.mxu0 0.0
    %1239 = vmatpush1.msra.mxu0 0.0
    %1240 = vmatprep.subr.mxu0 0.0
    %1241 = vmatpush1.msra.mxu0 0.0
    %1242 = vmatprep.subr.mxu0 0.0
    %1243 = vmatpush1.msra.mxu0 0.0
    %1244 = vmatprep.subr.mxu0 0.0
    %1245 = vmatpush1.msra.mxu0 0.0
    %1246 = vmatprep.subr.mxu0 0.0
    %1247 = vmatpush1.msra.mxu0 0.0
    %1248 = vmatprep.subr.mxu0 0.0
    %1249 = vmatpush1.msra.mxu0 0.0
    %1250 = vmatprep.subr.mxu0 0.0
    %1251 = vmatpush1.msra.mxu0 0.0
    %1252 = vmatprep.subr.mxu0 0.0
    %1253 = vmatpush1.msra.mxu0 0.0
    %1254 = vmatprep.subr.mxu0 0.0
    %1255 = vmatpush1.msra.mxu0 0.0
    %1256 = vmatprep.mubr.f32.mxu0 0.0
    %1257 = vmatmul.mubr.f32.gmra.mrb[0].mxu0 %v1119
    %v1258 = vpop.f32.mrb[0].mxu0
    %v1259 = vadd.f32 %v157, %v1258
    %v1260 = vpop.f32.mrb[0].mxu0
    %1261 = vdwg.mxu0
    %v1262 = vadd.f32 %v346, %v1188
    %v1263 = vadd.f32 %v348, %v1190
    %v1264 = vxor.u32 %v1262, 2147483648
    %v1265 = vxor.u32 %v1263, 2147483648
    %v1266 = vmul.f32 %v1264, 1.442695
    %v1267 = vpow.pop %v1266
    %v1268 = vmul.f32 %v1265, 1.442695
    %v1269 = vpow.pop %v1268
    %v1270 = vadd.f32 %v1267, 1.0
    %v1271 = vadd.f32 %v1269, 1.0
    %v1272 = vrcp.pop %v1270
    %v1273 = vmul.f32 1.0, %v1272
    %v1274 = vrcp.pop %v1271
    %v1275 = vmul.f32 1.0, %v1274
    %v1276 = vmul.f32 %v1273, %v1259
    %v1277 = vadd.f32 %v455, %v1276
    %v1278 = vtanh.pop %v1277
    %v1279 = vsub.f32 %v1119, %v1278
    %v1280 = vmul.f32 %v1275, %v1279
    %v1281 = vadd.f32 %v1278, %v1280
    %1282 = vst [vmem:[#allocation2 + $0x20] sm:$0xff] %v1281
    %1283 = vmatprep.subr.mxu0 %v74
    %1284 = vmatpush1.msra.mxu0 %v73
    %1285 = vmatprep.subr.mxu0 %v77
    %1286 = vmatpush1.msra.mxu0 %v76
    %1287 = vmatprep.subr.mxu0 %v80
    %1288 = vmatpush1.msra.mxu0 %v79
    %1289 = vmatprep.subr.mxu0 %v83
    %1290 = vmatpush1.msra.mxu0 %v82
    %1291 = vmatprep.subr.mxu0 %v86
    %1292 = vmatpush1.msra.mxu0 %v85
    %1293 = vmatprep.subr.mxu0 %v89
    %1294 = vmatpush1.msra.mxu0 %v88
    %1295 = vmatprep.subr.mxu0 %v92
    %1296 = vmatpush1.msra.mxu0 %v91
    %1297 = vmatprep.subr.mxu0 %v95
    %1298 = vmatpush1.msra.mxu0 %v94
    %1299 = vmatprep.subr.mxu0 %v98
    %1300 = vmatpush1.msra.mxu0 %v97
    %1301 = vmatprep.subr.mxu0 %v101
    %1302 = vmatpush1.msra.mxu0 %v100
    %1303 = vmatprep.subr.mxu0 %v104
    %1304 = vmatpush1.msra.mxu0 %v103
    %1305 = vmatprep.subr.mxu0 %v107
    %1306 = vmatpush1.msra.mxu0 %v106
    %1307 = vmatprep.subr.mxu0 %v110
    %1308 = vmatpush1.msra.mxu0 %v109
    %1309 = vmatprep.subr.mxu0 %v113
    %1310 = vmatpush1.msra.mxu0 %v112
    %1311 = vmatprep.subr.mxu0 %v116
    %1312 = vmatpush1.msra.mxu0 %v115
    %1313 = vmatprep.subr.mxu0 %v119
    %1314 = vmatpush1.msra.mxu0 %v118
    %1315 = vmatprep.subr.mxu0 0.0
    %1316 = vmatpush1.msra.mxu0 0.0
    %1317 = vmatprep.subr.mxu0 0.0
    %1318 = vmatpush1.msra.mxu0 0.0
    %1319 = vmatprep.subr.mxu0 0.0
    %1320 = vmatpush1.msra.mxu0 0.0
    %1321 = vmatprep.subr.mxu0 0.0
    %1322 = vmatpush1.msra.mxu0 0.0
    %1323 = vmatprep.subr.mxu0 0.0
    %1324 = vmatpush1.msra.mxu0 0.0
    %1325 = vmatprep.subr.mxu0 0.0
    %1326 = vmatpush1.msra.mxu0 0.0
    %1327 = vmatprep.subr.mxu0 0.0
    %1328 = vmatpush1.msra.mxu0 0.0
    %1329 = vmatprep.subr.mxu0 0.0
    %1330 = vmatpush1.msra.mxu0 0.0
    %1331 = vmatprep.subr.mxu0 0.0
    %1332 = vmatpush1.msra.mxu0 0.0
    %1333 = vmatprep.subr.mxu0 0.0
    %1334 = vmatpush1.msra.mxu0 0.0
    %1335 = vmatprep.subr.mxu0 0.0
    %1336 = vmatpush1.msra.mxu0 0.0
    %1337 = vmatprep.subr.mxu0 0.0
    %1338 = vmatpush1.msra.mxu0 0.0
    %1339 = vmatprep.subr.mxu0 0.0
    %1340 = vmatpush1.msra.mxu0 0.0
    %1341 = vmatprep.subr.mxu0 0.0
    %1342 = vmatpush1.msra.mxu0 0.0
    %1343 = vmatprep.subr.mxu0 0.0
    %1344 = vmatpush1.msra.mxu0 0.0
    %1345 = vmatprep.subr.mxu0 0.0
    %1346 = vmatpush1.msra.mxu0 0.0
    %1347 = vmatprep.mubr.f32.mxu0 0.0
    %1348 = vmatmul.mubr.f32.gmra.mrb[0].mxu0 %v1281
    %v1349 = vpop.f32.mrb[0].mxu0
    %v1350 = vadd.f32 %v155, %v1349
    %v1351 = vpop.f32.mrb[0].mxu0
    %v1352 = vadd.f32 %v156, %v1351
    %1353 = vdwg.mxu0
    %1354 = vmatprep.subr.mxu0 0.0
    %1355 = vmatpush1.msra.mxu0 %v75
    %1356 = vmatprep.subr.mxu0 0.0
    %1357 = vmatpush1.msra.mxu0 %v78
    %1358 = vmatprep.subr.mxu0 0.0
    %1359 = vmatpush1.msra.mxu0 %v81
    %1360 = vmatprep.subr.mxu0 0.0
    %1361 = vmatpush1.msra.mxu0 %v84
    %1362 = vmatprep.subr.mxu0 0.0
    %1363 = vmatpush1.msra.mxu0 %v87
    %1364 = vmatprep.subr.mxu0 0.0
    %1365 = vmatpush1.msra.mxu0 %v90
    %1366 = vmatprep.subr.mxu0 0.0
    %1367 = vmatpush1.msra.mxu0 %v93
    %1368 = vmatprep.subr.mxu0 0.0
    %1369 = vmatpush1.msra.mxu0 %v96
    %1370 = vmatprep.subr.mxu0 0.0
    %1371 = vmatpush1.msra.mxu0 %v99
    %1372 = vmatprep.subr.mxu0 0.0
    %1373 = vmatpush1.msra.mxu0 %v102
    %1374 = vmatprep.subr.mxu0 0.0
    %1375 = vmatpush1.msra.mxu0 %v105
    %1376 = vmatprep.subr.mxu0 0.0
    %1377 = vmatpush1.msra.mxu0 %v108
    %1378 = vmatprep.subr.mxu0 0.0
    %1379 = vmatpush1.msra.mxu0 %v111
    %1380 = vmatprep.subr.mxu0 0.0
    %1381 = vmatpush1.msra.mxu0 %v114
    %1382 = vmatprep.subr.mxu0 0.0
    %1383 = vmatpush1.msra.mxu0 %v117
    %1384 = vmatprep.subr.mxu0 0.0
    %1385 = vmatpush1.msra.mxu0 %v120
    %1386 = vmatprep.subr.mxu0 0.0
    %1387 = vmatpush1.msra.mxu0 0.0
    %1388 = vmatprep.subr.mxu0 0.0
    %1389 = vmatpush1.msra.mxu0 0.0
    %1390 = vmatprep.subr.mxu0 0.0
    %1391 = vmatpush1.msra.mxu0 0.0
    %1392 = vmatprep.subr.mxu0 0.0
    %1393 = vmatpush1.msra.mxu0 0.0
    %1394 = vmatprep.subr.mxu0 0.0
    %1395 = vmatpush1.msra.mxu0 0.0
    %1396 = vmatprep.subr.mxu0 0.0
    %1397 = vmatpush1.msra.mxu0 0.0
    %1398 = vmatprep.subr.mxu0 0.0
    %1399 = vmatpush1.msra.mxu0 0.0
    %1400 = vmatprep.subr.mxu0 0.0
    %1401 = vmatpush1.msra.mxu0 0.0
    %1402 = vmatprep.subr.mxu0 0.0
    %1403 = vmatpush1.msra.mxu0 0.0
    %1404 = vmatprep.subr.mxu0 0.0
    %1405 = vmatpush1.msra.mxu0 0.0
    %1406 = vmatprep.subr.mxu0 0.0
    %1407 = vmatpush1.msra.mxu0 0.0
    %1408 = vmatprep.subr.mxu0 0.0
    %1409 = vmatpush1.msra.mxu0 0.0
    %1410 = vmatprep.subr.mxu0 0.0
    %1411 = vmatpush1.msra.mxu0 0.0
    %1412 = vmatprep.subr.mxu0 0.0
    %1413 = vmatpush1.msra.mxu0 0.0
    %1414 = vmatprep.subr.mxu0 0.0
    %1415 = vmatpush1.msra.mxu0 0.0
    %1416 = vmatprep.subr.mxu0 0.0
    %1417 = vmatpush1.msra.mxu0 0.0
    %1418 = vmatprep.mubr.f32.mxu0 0.0
    %1419 = vmatmul.mubr.f32.gmra.mrb[0].mxu0 %v1281
    %v1420 = vpop.f32.mrb[0].mxu0
    %v1421 = vadd.f32 %v157, %v1420
    %v1422 = vpop.f32.mrb[0].mxu0
    %1423 = vdwg.mxu0
    %v1424 = vadd.f32 %v352, %v1350
    %v1425 = vadd.f32 %v354, %v1352
    %v1426 = vxor.u32 %v1424, 2147483648
    %v1427 = vxor.u32 %v1425, 2147483648
    %v1428 = vmul.f32 %v1426, 1.442695
    %v1429 = vpow.pop %v1428
    %v1430 = vmul.f32 %v1427, 1.442695
    %v1431 = vpow.pop %v1430
    %v1432 = vadd.f32 %v1429, 1.0
    %v1433 = vadd.f32 %v1431, 1.0
    %v1434 = vrcp.pop %v1432
    %v1435 = vmul.f32 1.0, %v1434
    %v1436 = vrcp.pop %v1433
    %v1437 = vmul.f32 1.0, %v1436
    %v1438 = vmul.f32 %v1435, %v1421
    %v1439 = vadd.f32 %v460, %v1438
    %v1440 = vtanh.pop %v1439
    %v1441 = vsub.f32 %v1281, %v1440
    %v1442 = vmul.f32 %v1437, %v1441
    %v1443 = vadd.f32 %v1440, %v1442
    %1444 = vst [vmem:[#allocation2 + $0x28] sm:$0xff] %v1443
    %1445 = vmatprep.subr.mxu0 %v74
    %1446 = vmatpush1.msra.mxu0 %v73
    %1447 = vmatprep.subr.mxu0 %v77
    %1448 = vmatpush1.msra.mxu0 %v76
    %1449 = vmatprep.subr.mxu0 %v80
    %1450 = vmatpush1.msra.mxu0 %v79
    %1451 = vmatprep.subr.mxu0 %v83
    %1452 = vmatpush1.msra.mxu0 %v82
    %1453 = vmatprep.subr.mxu0 %v86
    %1454 = vmatpush1.msra.mxu0 %v85
    %1455 = vmatprep.subr.mxu0 %v89
    %1456 = vmatpush1.msra.mxu0 %v88
    %1457 = vmatprep.subr.mxu0 %v92
    %1458 = vmatpush1.msra.mxu0 %v91
    %1459 = vmatprep.subr.mxu0 %v95
    %1460 = vmatpush1.msra.mxu0 %v94
    %1461 = vmatprep.subr.mxu0 %v98
    %1462 = vmatpush1.msra.mxu0 %v97
    %1463 = vmatprep.subr.mxu0 %v101
    %1464 = vmatpush1.msra.mxu0 %v100
    %1465 = vmatprep.subr.mxu0 %v104
    %1466 = vmatpush1.msra.mxu0 %v103
    %1467 = vmatprep.subr.mxu0 %v107
    %1468 = vmatpush1.msra.mxu0 %v106
    %1469 = vmatprep.subr.mxu0 %v110
    %1470 = vmatpush1.msra.mxu0 %v109
    %1471 = vmatprep.subr.mxu0 %v113
    %1472 = vmatpush1.msra.mxu0 %v112
    %1473 = vmatprep.subr.mxu0 %v116
    %1474 = vmatpush1.msra.mxu0 %v115
    %1475 = vmatprep.subr.mxu0 %v119
    %1476 = vmatpush1.msra.mxu0 %v118
    %1477 = vmatprep.subr.mxu0 0.0
    %1478 = vmatpush1.msra.mxu0 0.0
    %1479 = vmatprep.subr.mxu0 0.0
    %1480 = vmatpush1.msra.mxu0 0.0
    %1481 = vmatprep.subr.mxu0 0.0
    %1482 = vmatpush1.msra.mxu0 0.0
    %1483 = vmatprep.subr.mxu0 0.0
    %1484 = vmatpush1.msra.mxu0 0.0
    %1485 = vmatprep.subr.mxu0 0.0
    %1486 = vmatpush1.msra.mxu0 0.0
    %1487 = vmatprep.subr.mxu0 0.0
    %1488 = vmatpush1.msra.mxu0 0.0
    %1489 = vmatprep.subr.mxu0 0.0
    %1490 = vmatpush1.msra.mxu0 0.0
    %1491 = vmatprep.subr.mxu0 0.0
    %1492 = vmatpush1.msra.mxu0 0.0
    %1493 = vmatprep.subr.mxu0 0.0
    %1494 = vmatpush1.msra.mxu0 0.0
    %1495 = vmatprep.subr.mxu0 0.0
    %1496 = vmatpush1.msra.mxu0 0.0
    %1497 = vmatprep.subr.mxu0 0.0
    %1498 = vmatpush1.msra.mxu0 0.0
    %1499 = vmatprep.subr.mxu0 0.0
    %1500 = vmatpush1.msra.mxu0 0.0
    %1501 = vmatprep.subr.mxu0 0.0
    %1502 = vmatpush1.msra.mxu0 0.0
    %1503 = vmatprep.subr.mxu0 0.0
    %1504 = vmatpush1.msra.mxu0 0.0
    %1505 = vmatprep.subr.mxu0 0.0
    %1506 = vmatpush1.msra.mxu0 0.0
    %1507 = vmatprep.subr.mxu0 0.0
    %1508 = vmatpush1.msra.mxu0 0.0
    %1509 = vmatprep.mubr.f32.mxu0 0.0
    %1510 = vmatmul.mubr.f32.gmra.mrb[0].mxu0 %v1443
    %v1511 = vpop.f32.mrb[0].mxu0
    %v1512 = vadd.f32 %v155, %v1511
    %v1513 = vpop.f32.mrb[0].mxu0
    %v1514 = vadd.f32 %v156, %v1513
    %1515 = vdwg.mxu0
    %1516 = vmatprep.subr.mxu0 0.0
    %1517 = vmatpush1.msra.mxu0 %v75
    %1518 = vmatprep.subr.mxu0 0.0
    %1519 = vmatpush1.msra.mxu0 %v78
    %1520 = vmatprep.subr.mxu0 0.0
    %1521 = vmatpush1.msra.mxu0 %v81
    %1522 = vmatprep.subr.mxu0 0.0
    %1523 = vmatpush1.msra.mxu0 %v84
    %1524 = vmatprep.subr.mxu0 0.0
    %1525 = vmatpush1.msra.mxu0 %v87
    %1526 = vmatprep.subr.mxu0 0.0
    %1527 = vmatpush1.msra.mxu0 %v90
    %1528 = vmatprep.subr.mxu0 0.0
    %1529 = vmatpush1.msra.mxu0 %v93
    %1530 = vmatprep.subr.mxu0 0.0
    %1531 = vmatpush1.msra.mxu0 %v96
    %1532 = vmatprep.subr.mxu0 0.0
    %1533 = vmatpush1.msra.mxu0 %v99
    %1534 = vmatprep.subr.mxu0 0.0
    %1535 = vmatpush1.msra.mxu0 %v102
    %1536 = vmatprep.subr.mxu0 0.0
    %1537 = vmatpush1.msra.mxu0 %v105
    %1538 = vmatprep.subr.mxu0 0.0
    %1539 = vmatpush1.msra.mxu0 %v108
    %1540 = vmatprep.subr.mxu0 0.0
    %1541 = vmatpush1.msra.mxu0 %v111
    %1542 = vmatprep.subr.mxu0 0.0
    %1543 = vmatpush1.msra.mxu0 %v114
    %1544 = vmatprep.subr.mxu0 0.0
    %1545 = vmatpush1.msra.mxu0 %v117
    %1546 = vmatprep.subr.mxu0 0.0
    %1547 = vmatpush1.msra.mxu0 %v120
    %1548 = vmatprep.subr.mxu0 0.0
    %1549 = vmatpush1.msra.mxu0 0.0
    %1550 = vmatprep.subr.mxu0 0.0
    %1551 = vmatpush1.msra.mxu0 0.0
    %1552 = vmatprep.subr.mxu0 0.0
    %1553 = vmatpush1.msra.mxu0 0.0
    %1554 = vmatprep.subr.mxu0 0.0
    %1555 = vmatpush1.msra.mxu0 0.0
    %1556 = vmatprep.subr.mxu0 0.0
    %1557 = vmatpush1.msra.mxu0 0.0
    %1558 = vmatprep.subr.mxu0 0.0
    %1559 = vmatpush1.msra.mxu0 0.0
    %1560 = vmatprep.subr.mxu0 0.0
    %1561 = vmatpush1.msra.mxu0 0.0
    %1562 = vmatprep.subr.mxu0 0.0
    %1563 = vmatpush1.msra.mxu0 0.0
    %1564 = vmatprep.subr.mxu0 0.0
    %1565 = vmatpush1.msra.mxu0 0.0
    %1566 = vmatprep.subr.mxu0 0.0
    %1567 = vmatpush1.msra.mxu0 0.0
    %1568 = vmatprep.subr.mxu0 0.0
    %1569 = vmatpush1.msra.mxu0 0.0
    %1570 = vmatprep.subr.mxu0 0.0
    %1571 = vmatpush1.msra.mxu0 0.0
    %1572 = vmatprep.subr.mxu0 0.0
    %1573 = vmatpush1.msra.mxu0 0.0
    %1574 = vmatprep.subr.mxu0 0.0
    %1575 = vmatpush1.msra.mxu0 0.0
    %1576 = vmatprep.subr.mxu0 0.0
    %1577 = vmatpush1.msra.mxu0 0.0
    %1578 = vmatprep.subr.mxu0 0.0
    %1579 = vmatpush1.msra.mxu0 0.0
    %1580 = vmatprep.mubr.f32.mxu0 0.0
    %1581 = vmatmul.mubr.f32.gmra.mrb[0].mxu0 %v1443
    %v1582 = vpop.f32.mrb[0].mxu0
    %v1583 = vadd.f32 %v157, %v1582
    %v1584 = vpop.f32.mrb[0].mxu0
    %1585 = vdwg.mxu0
    %v1586 = vadd.f32 %v358, %v1512
    %v1587 = vadd.f32 %v360, %v1514
    %v1588 = vxor.u32 %v1586, 2147483648
    %v1589 = vxor.u32 %v1587, 2147483648
    %v1590 = vmul.f32 %v1588, 1.442695
    %v1591 = vpow.pop %v1590
    %v1592 = vmul.f32 %v1589, 1.442695
    %v1593 = vpow.pop %v1592
    %v1594 = vadd.f32 %v1591, 1.0
    %v1595 = vadd.f32 %v1593, 1.0
    %v1596 = vrcp.pop %v1594
    %v1597 = vmul.f32 1.0, %v1596
    %v1598 = vrcp.pop %v1595
    %v1599 = vmul.f32 1.0, %v1598
    %v1600 = vmul.f32 %v1597, %v1583
    %v1601 = vadd.f32 %v465, %v1600
    %v1602 = vtanh.pop %v1601
    %v1603 = vsub.f32 %v1443, %v1602
    %v1604 = vmul.f32 %v1599, %v1603
    %v1605 = vadd.f32 %v1602, %v1604
    %1606 = vst [vmem:[#allocation2 + $0x30] sm:$0xff] %v1605
    %1607 = vmatprep.subr.mxu0 %v74
    %1608 = vmatpush1.msra.mxu0 %v73
    %1609 = vmatprep.subr.mxu0 %v77
    %1610 = vmatpush1.msra.mxu0 %v76
    %1611 = vmatprep.subr.mxu0 %v80
    %1612 = vmatpush1.msra.mxu0 %v79
    %1613 = vmatprep.subr.mxu0 %v83
    %1614 = vmatpush1.msra.mxu0 %v82
    %1615 = vmatprep.subr.mxu0 %v86
    %1616 = vmatpush1.msra.mxu0 %v85
    %1617 = vmatprep.subr.mxu0 %v89
    %1618 = vmatpush1.msra.mxu0 %v88
    %1619 = vmatprep.subr.mxu0 %v92
    %1620 = vmatpush1.msra.mxu0 %v91
    %1621 = vmatprep.subr.mxu0 %v95
    %1622 = vmatpush1.msra.mxu0 %v94
    %1623 = vmatprep.subr.mxu0 %v98
    %1624 = vmatpush1.msra.mxu0 %v97
    %1625 = vmatprep.subr.mxu0 %v101
    %1626 = vmatpush1.msra.mxu0 %v100
    %1627 = vmatprep.subr.mxu0 %v104
    %1628 = vmatpush1.msra.mxu0 %v103
    %1629 = vmatprep.subr.mxu0 %v107
    %1630 = vmatpush1.msra.mxu0 %v106
    %1631 = vmatprep.subr.mxu0 %v110
    %1632 = vmatpush1.msra.mxu0 %v109
    %1633 = vmatprep.subr.mxu0 %v113
    %1634 = vmatpush1.msra.mxu0 %v112
    %1635 = vmatprep.subr.mxu0 %v116
    %1636 = vmatpush1.msra.mxu0 %v115
    %1637 = vmatprep.subr.mxu0 %v119
    %1638 = vmatpush1.msra.mxu0 %v118
    %1639 = vmatprep.subr.mxu0 0.0
    %1640 = vmatpush1.msra.mxu0 0.0
    %1641 = vmatprep.subr.mxu0 0.0
    %1642 = vmatpush1.msra.mxu0 0.0
    %1643 = vmatprep.subr.mxu0 0.0
    %1644 = vmatpush1.msra.mxu0 0.0
    %1645 = vmatprep.subr.mxu0 0.0
    %1646 = vmatpush1.msra.mxu0 0.0
    %1647 = vmatprep.subr.mxu0 0.0
    %1648 = vmatpush1.msra.mxu0 0.0
    %1649 = vmatprep.subr.mxu0 0.0
    %1650 = vmatpush1.msra.mxu0 0.0
    %1651 = vmatprep.subr.mxu0 0.0
    %1652 = vmatpush1.msra.mxu0 0.0
    %1653 = vmatprep.subr.mxu0 0.0
    %1654 = vmatpush1.msra.mxu0 0.0
    %1655 = vmatprep.subr.mxu0 0.0
    %1656 = vmatpush1.msra.mxu0 0.0
    %1657 = vmatprep.subr.mxu0 0.0
    %1658 = vmatpush1.msra.mxu0 0.0
    %1659 = vmatprep.subr.mxu0 0.0
    %1660 = vmatpush1.msra.mxu0 0.0
    %1661 = vmatprep.subr.mxu0 0.0
    %1662 = vmatpush1.msra.mxu0 0.0
    %1663 = vmatprep.subr.mxu0 0.0
    %1664 = vmatpush1.msra.mxu0 0.0
    %1665 = vmatprep.subr.mxu0 0.0
    %1666 = vmatpush1.msra.mxu0 0.0
    %1667 = vmatprep.subr.mxu0 0.0
    %1668 = vmatpush1.msra.mxu0 0.0
    %1669 = vmatprep.subr.mxu0 0.0
    %1670 = vmatpush1.msra.mxu0 0.0
    %1671 = vmatprep.mubr.f32.mxu0 0.0
    %1672 = vmatmul.mubr.f32.gmra.mrb[0].mxu0 %v1605
    %v1673 = vpop.f32.mrb[0].mxu0
    %v1674 = vadd.f32 %v155, %v1673
    %v1675 = vpop.f32.mrb[0].mxu0
    %v1676 = vadd.f32 %v156, %v1675
    %1677 = vdwg.mxu0
    %1678 = vmatprep.subr.mxu0 0.0
    %1679 = vmatpush1.msra.mxu0 %v75
    %1680 = vmatprep.subr.mxu0 0.0
    %1681 = vmatpush1.msra.mxu0 %v78
    %1682 = vmatprep.subr.mxu0 0.0
    %1683 = vmatpush1.msra.mxu0 %v81
    %1684 = vmatprep.subr.mxu0 0.0
    %1685 = vmatpush1.msra.mxu0 %v84
    %1686 = vmatprep.subr.mxu0 0.0
    %1687 = vmatpush1.msra.mxu0 %v87
    %1688 = vmatprep.subr.mxu0 0.0
    %1689 = vmatpush1.msra.mxu0 %v90
    %1690 = vmatprep.subr.mxu0 0.0
    %1691 = vmatpush1.msra.mxu0 %v93
    %1692 = vmatprep.subr.mxu0 0.0
    %1693 = vmatpush1.msra.mxu0 %v96
    %1694 = vmatprep.subr.mxu0 0.0
    %1695 = vmatpush1.msra.mxu0 %v99
    %1696 = vmatprep.subr.mxu0 0.0
    %1697 = vmatpush1.msra.mxu0 %v102
    %1698 = vmatprep.subr.mxu0 0.0
    %1699 = vmatpush1.msra.mxu0 %v105
    %1700 = vmatprep.subr.mxu0 0.0
    %1701 = vmatpush1.msra.mxu0 %v108
    %1702 = vmatprep.subr.mxu0 0.0
    %1703 = vmatpush1.msra.mxu0 %v111
    %1704 = vmatprep.subr.mxu0 0.0
    %1705 = vmatpush1.msra.mxu0 %v114
    %1706 = vmatprep.subr.mxu0 0.0
    %1707 = vmatpush1.msra.mxu0 %v117
    %1708 = vmatprep.subr.mxu0 0.0
    %1709 = vmatpush1.msra.mxu0 %v120
    %1710 = vmatprep.subr.mxu0 0.0
    %1711 = vmatpush1.msra.mxu0 0.0
    %1712 = vmatprep.subr.mxu0 0.0
    %1713 = vmatpush1.msra.mxu0 0.0
    %1714 = vmatprep.subr.mxu0 0.0
    %1715 = vmatpush1.msra.mxu0 0.0
    %1716 = vmatprep.subr.mxu0 0.0
    %1717 = vmatpush1.msra.mxu0 0.0
    %1718 = vmatprep.subr.mxu0 0.0
    %1719 = vmatpush1.msra.mxu0 0.0
    %1720 = vmatprep.subr.mxu0 0.0
    %1721 = vmatpush1.msra.mxu0 0.0
    %1722 = vmatprep.subr.mxu0 0.0
    %1723 = vmatpush1.msra.mxu0 0.0
    %1724 = vmatprep.subr.mxu0 0.0
    %1725 = vmatpush1.msra.mxu0 0.0
    %1726 = vmatprep.subr.mxu0 0.0
    %1727 = vmatpush1.msra.mxu0 0.0
    %1728 = vmatprep.subr.mxu0 0.0
    %1729 = vmatpush1.msra.mxu0 0.0
    %1730 = vmatprep.subr.mxu0 0.0
    %1731 = vmatpush1.msra.mxu0 0.0
    %1732 = vmatprep.subr.mxu0 0.0
    %1733 = vmatpush1.msra.mxu0 0.0
    %1734 = vmatprep.subr.mxu0 0.0
    %1735 = vmatpush1.msra.mxu0 0.0
    %1736 = vmatprep.subr.mxu0 0.0
    %1737 = vmatpush1.msra.mxu0 0.0
    %1738 = vmatprep.subr.mxu0 0.0
    %1739 = vmatpush1.msra.mxu0 0.0
    %1740 = vmatprep.subr.mxu0 0.0
    %1741 = vmatpush1.msra.mxu0 0.0
    %1742 = vmatprep.mubr.f32.mxu0 0.0
    %1743 = vmatmul.mubr.f32.gmra.mrb[0].mxu0 %v1605
    %v1744 = vpop.f32.mrb[0].mxu0
    %v1745 = vadd.f32 %v157, %v1744
    %v1746 = vpop.f32.mrb[0].mxu0
    %1747 = vdwg.mxu0
    %v1748 = vadd.f32 %v364, %v1674
    %v1749 = vadd.f32 %v366, %v1676
    %v1750 = vxor.u32 %v1748, 2147483648
    %v1751 = vxor.u32 %v1749, 2147483648
    %v1752 = vmul.f32 %v1750, 1.442695
    %v1753 = vpow.pop %v1752
    %v1754 = vmul.f32 %v1751, 1.442695
    %v1755 = vpow.pop %v1754
    %v1756 = vadd.f32 %v1753, 1.0
    %v1757 = vadd.f32 %v1755, 1.0
    %v1758 = vrcp.pop %v1756
    %v1759 = vmul.f32 1.0, %v1758
    %v1760 = vrcp.pop %v1757
    %v1761 = vmul.f32 1.0, %v1760
    %v1762 = vmul.f32 %v1759, %v1745
    %v1763 = vadd.f32 %v470, %v1762
    %v1764 = vtanh.pop %v1763
    %v1765 = vsub.f32 %v1605, %v1764
    %v1766 = vmul.f32 %v1761, %v1765
    %v1767 = vadd.f32 %v1764, %v1766
    %1768 = vst [vmem:[#allocation2 + $0x38] sm:$0xff] %v1767
    %v1769 = vld [vmem:[#allocation2] sm:$0xff]
    %v1770 = vld [vmem:[#allocation2 + $0x8] sm:$0xff]
    %v1771 = vld [vmem:[#allocation2 + $0x10] sm:$0xff]
    %v1772 = vld [vmem:[#allocation2 + $0x18] sm:$0xff]
    %v1773 = vld [vmem:[#allocation2 + $0x20] sm:$0xff]
    %v1774 = vld [vmem:[#allocation2 + $0x28] sm:$0xff]
    %v1775 = vld [vmem:[#allocation2 + $0x30] sm:$0xff]
    %v1776 = vld [vmem:[#allocation2 + $0x38] sm:$0xff]
    %1777 = vmatprep.subr.mxu0 0.0
    %1778 = vmatpush1.msra.mxu0 %v137
    %1779 = vmatprep.subr.mxu0 0.0
    %1780 = vmatpush1.msra.mxu0 %v138
    %1781 = vmatprep.subr.mxu0 0.0
    %1782 = vmatpush1.msra.mxu0 %v139
    %1783 = vmatprep.subr.mxu0 0.0
    %1784 = vmatpush1.msra.mxu0 %v140
    %1785 = vmatprep.subr.mxu0 0.0
    %1786 = vmatpush1.msra.mxu0 %v141
    %1787 = vmatprep.subr.mxu0 0.0
    %1788 = vmatpush1.msra.mxu0 %v142
    %1789 = vmatprep.subr.mxu0 0.0
    %1790 = vmatpush1.msra.mxu0 %v143
    %1791 = vmatprep.subr.mxu0 0.0
    %1792 = vmatpush1.msra.mxu0 %v144
    %1793 = vmatprep.subr.mxu0 0.0
    %1794 = vmatpush1.msra.mxu0 %v145
    %1795 = vmatprep.subr.mxu0 0.0
    %1796 = vmatpush1.msra.mxu0 %v146
    %1797 = vmatprep.subr.mxu0 0.0
    %1798 = vmatpush1.msra.mxu0 %v147
    %1799 = vmatprep.subr.mxu0 0.0
    %1800 = vmatpush1.msra.mxu0 %v148
    %1801 = vmatprep.subr.mxu0 0.0
    %1802 = vmatpush1.msra.mxu0 %v149
    %1803 = vmatprep.subr.mxu0 0.0
    %1804 = vmatpush1.msra.mxu0 %v150
    %1805 = vmatprep.subr.mxu0 0.0
    %1806 = vmatpush1.msra.mxu0 %v151
    %1807 = vmatprep.subr.mxu0 0.0
    %1808 = vmatpush1.msra.mxu0 %v152
    %1809 = vmatprep.subr.mxu0 0.0
    %1810 = vmatpush1.msra.mxu0 0.0
    %1811 = vmatprep.subr.mxu0 0.0
    %1812 = vmatpush1.msra.mxu0 0.0
    %1813 = vmatprep.subr.mxu0 0.0
    %1814 = vmatpush1.msra.mxu0 0.0
    %1815 = vmatprep.subr.mxu0 0.0
    %1816 = vmatpush1.msra.mxu0 0.0
    %1817 = vmatprep.subr.mxu0 0.0
    %1818 = vmatpush1.msra.mxu0 0.0
    %1819 = vmatprep.subr.mxu0 0.0
    %1820 = vmatpush1.msra.mxu0 0.0
    %1821 = vmatprep.subr.mxu0 0.0
    %1822 = vmatpush1.msra.mxu0 0.0
    %1823 = vmatprep.subr.mxu0 0.0
    %1824 = vmatpush1.msra.mxu0 0.0
    %1825 = vmatprep.subr.mxu0 0.0
    %1826 = vmatpush1.msra.mxu0 0.0
    %1827 = vmatprep.subr.mxu0 0.0
    %1828 = vmatpush1.msra.mxu0 0.0
    %1829 = vmatprep.subr.mxu0 0.0
    %1830 = vmatpush1.msra.mxu0 0.0
    %1831 = vmatprep.subr.mxu0 0.0
    %1832 = vmatpush1.msra.mxu0 0.0
    %1833 = vmatprep.subr.mxu0 0.0
    %1834 = vmatpush1.msra.mxu0 0.0
    %1835 = vmatprep.subr.mxu0 0.0
    %1836 = vmatpush1.msra.mxu0 0.0
    %1837 = vmatprep.subr.mxu0 0.0
    %1838 = vmatpush1.msra.mxu0 0.0
    %1839 = vmatprep.subr.mxu0 0.0
    %1840 = vmatpush1.msra.mxu0 0.0
    %1841 = vmatprep.mubr.f32.mxu0 0.0
    %1842 = vmatmul.mubr.f32.gmra.mrb[0].mxu0 %v1769
    %v1843 = vpop.f32.mrb[0].mxu0
    %v1844 = vadd.f32 0.0, %v1843
    %v1845 = vpop.f32.mrb[0].mxu0
    %1846 = vmatprep.mubr.f32.mxu0 0.0
    %1847 = vmatmul.mubr.f32.gmra.mrb[0].mxu0 %v1770
    %v1848 = vpop.f32.mrb[0].mxu0
    %v1849 = vadd.f32 0.0, %v1848
    %v1850 = vpop.f32.mrb[0].mxu0
    %1851 = vmatprep.mubr.f32.mxu0 0.0
    %1852 = vmatmul.mubr.f32.gmra.mrb[0].mxu0 %v1771
    %v1853 = vpop.f32.mrb[0].mxu0
    %v1854 = vadd.f32 0.0, %v1853
    %v1855 = vpop.f32.mrb[0].mxu0
    %1856 = vmatprep.mubr.f32.mxu0 0.0
    %1857 = vmatmul.mubr.f32.gmra.mrb[0].mxu0 %v1772
    %v1858 = vpop.f32.mrb[0].mxu0
    %v1859 = vadd.f32 0.0, %v1858
    %v1860 = vpop.f32.mrb[0].mxu0
    %1861 = vmatprep.mubr.f32.mxu0 0.0
    %1862 = vmatmul.mubr.f32.gmra.mrb[0].mxu0 %v1773
    %v1863 = vpop.f32.mrb[0].mxu0
    %v1864 = vadd.f32 0.0, %v1863
    %v1865 = vpop.f32.mrb[0].mxu0
    %1866 = vmatprep.mubr.f32.mxu0 0.0
    %1867 = vmatmul.mubr.f32.gmra.mrb[0].mxu0 %v1774
    %v1868 = vpop.f32.mrb[0].mxu0
    %v1869 = vadd.f32 0.0, %v1868
    %v1870 = vpop.f32.mrb[0].mxu0
    %1871 = vmatprep.mubr.f32.mxu0 0.0
    %1872 = vmatmul.mubr.f32.gmra.mrb[0].mxu0 %v1775
    %v1873 = vpop.f32.mrb[0].mxu0
    %v1874 = vadd.f32 0.0, %v1873
    %v1875 = vpop.f32.mrb[0].mxu0
    %1876 = vmatprep.mubr.f32.mxu0 0.0
    %1877 = vmatmul.mubr.f32.gmra.mrb[0].mxu0 %v1776
    %v1878 = vpop.f32.mrb[0].mxu0
    %v1879 = vadd.f32 0.0, %v1878
    %v1880 = vpop.f32.mrb[0].mxu0
    %1881 = vdwg.mxu0
    %v1882 = vadd.f32 %v1844, %v159
    %1883 = vst [vmem:[%s2] sm:$0xff] %v1882
    %v1884 = vadd.f32 %v1882, %v1849
    %v1885 = vadd.f32 %v1884, %v159
    %1886 = vst [vmem:[%s2 + $0x8] sm:$0xff] %v1885
    %v1887 = vadd.f32 %v1885, %v1854
    %v1888 = vadd.f32 %v1887, %v159
    %1889 = vst [vmem:[%s2 + $0x10] sm:$0xff] %v1888
    %v1890 = vadd.f32 %v1888, %v1859
    %v1891 = vadd.f32 %v1890, %v159
    %1892 = vst [vmem:[%s2 + $0x18] sm:$0xff] %v1891
    %v1893 = vadd.f32 %v1891, %v1864
    %v1894 = vadd.f32 %v1893, %v159
    %1895 = vst [vmem:[%s2 + $0x20] sm:$0xff] %v1894
    %v1896 = vadd.f32 %v1894, %v1869
    %v1897 = vadd.f32 %v1896, %v159
    %1898 = vst [vmem:[%s2 + $0x28] sm:$0xff] %v1897
    %v1899 = vadd.f32 %v1897, %v1874
    %v1900 = vadd.f32 %v1899, %v159
    %1901 = vst [vmem:[%s2 + $0x30] sm:$0xff] %v1900
    %v1902 = vadd.f32 %v1900, %v1879
    %v1903 = vadd.f32 %v1902, %v159
    %1904 = vst [vmem:[%s2 + $0x38] sm:$0xff] %v1903
    // Predicated region
    $region14: #{gru_waypoints_predictor.1} parent=1 // pred_check
      _
    $region15: #{gru_waypoints_predictor.1} parent=1 // pred_check_branch
      %1906 = sbr.rel (0) target = $region17
    $region16: #{gru_waypoints_predictor.1} parent=1 // pred_region
      _
    $region17: #{gru_waypoints_predictor.1} parent=1 // pred_fallthru
      _
    // Predicated region
    $region18: #{gru_waypoints_predictor.1} parent=1 // pred_check
      _
    $region19: #{gru_waypoints_predictor.1} parent=1 // pred_check_branch
      %1908 = sbr.rel (0) target = $region21
    $region20: #{gru_waypoints_predictor.1} parent=1 // pred_region
      _
    $region21: #{gru_waypoints_predictor.1} parent=1 // pred_fallthru
      _
    %1909 = vsyncpa [#allocation4], 1

</llo_original>
